<compile_context>
chip_gen: v7x
topology: tpu7x:2x2x1
jax: 0.10.0
libtpu: 0.0.40
codegen_flags: <defaults>
</compile_context>

<pallas_src>
import math

import jax
import jax.numpy as jnp
from jax.experimental import pallas as pl
from jax.experimental.pallas import tpu as pltpu

_LANE = 128
_TARGET_BLOCK_BYTES = 4 * 1024 * 1024     # ~4 MiB per block (see header)
_VMEM_LIMIT_BYTES = 32 * 1024 * 1024      # explicit: 4 buffers x 4 MiB + headroom
_SMALL_BYPASS_BYTES = 512 * 1024          # below this, XLA's fused clip wins


def _clamp_kernel(bounds_ref, x_ref, o_ref):
    """Elementwise clamp; bounds come from SMEM as f32 (-inf/+inf if unset)."""
    x = x_ref[...]
    lo = bounds_ref[0].astype(x.dtype)
    hi = bounds_ref[1].astype(x.dtype)
    # torch.clamp applies min first, then max: min(max(x, lo), hi).
    o_ref[...] = jnp.minimum(jnp.maximum(x, lo), hi)


def _choose_lanes(n):
    """Widest multiple-of-128 lane count that divides n (None -> ragged)."""
    for lanes in (1024, 512, 256, 128):
        if n % lanes == 0:
            return lanes
    return None


def _round_up(a, b):
    return (a + b - 1) // b * b


def _clamp_2d(x2d, bounds):
    """Run the Pallas clamp over a lane-dense (rows, lanes) slab."""
    rows, lanes = x2d.shape
    dtype = x2d.dtype
    itemsize = jnp.dtype(dtype).itemsize

    # Native packed sublane tile: 8 for 32-bit, 16 for 16-bit, 32 for 8-bit.
    sublane = 8 * max(1, 4 // itemsize)

    # ~4 MiB blocks, rounded down to a sublane multiple.
    block_rows = max(sublane,
                     (_TARGET_BLOCK_BYTES // (lanes * itemsize)) // sublane * sublane)
    if block_rows >= rows:
        if rows >= 2 * sublane:
            # Split into at least 2 grid steps so the "parallel" axis can be
            # sharded across v7x's two TensorCores (no-op on 1-TC chips).
            block_rows = _round_up(pl.cdiv(rows, 2), sublane)
        else:
            # Full extent along rows is always a legal block shape.
            block_rows = rows

    grid = (pl.cdiv(rows, block_rows),)  # partial edge block is masked by Pallas

    return pl.pallas_call(
        _clamp_kernel,
        out_shape=jax.ShapeDtypeStruct((rows, lanes), dtype),
        grid_spec=pl.GridSpec(
            grid=grid,
            in_specs=[
                pl.BlockSpec(memory_space=pltpu.MemorySpace.SMEM),  # bounds f32[2]
                pl.BlockSpec((block_rows, lanes), lambda i: (i, 0)),
            ],
            out_specs=pl.BlockSpec((block_rows, lanes), lambda i: (i, 0)),
        ),
        compiler_params=pltpu.CompilerParams(
            dimension_semantics=("parallel",),
            vmem_limit_bytes=_VMEM_LIMIT_BYTES,
        ),
    )(bounds, x2d)


def deephi_clamp(x, min=None, max=None):
    """JAX/Pallas equivalent of deephi_clamp.forward (quantization = identity).

    x   : any-shape floating array (e.g. NCHW activation)
    min : static scalar lower bound or None
    max : static scalar upper bound or None
    """
    # TODO(synk): quantize_tensors() is an identity when no quantizer is
    # configured; fake-quant behaviour (quant_mode on) is not modelled here.
    if min is None and max is None:
        return x

    if not jnp.issubdtype(x.dtype, jnp.floating):
        # TODO(synk): integer-dtype clamp (torch promotes/errors) not modelled;
        # module is documented for float/double only.
        return jnp.clip(x, min, max)

    mn = float("-inf") if min is None else float(min)
    mx = float("inf") if max is None else float(max)
    lo_d = jnp.asarray(mn, dtype=x.dtype)
    hi_d = jnp.asarray(mx, dtype=x.dtype)

    orig_shape = x.shape
    n = math.prod(orig_shape) if orig_shape else 1
    nbytes = n * jnp.dtype(x.dtype).itemsize

    # Small-tensor bypass: pallas_call launch overhead dominates here and the
    # fused XLA elementwise clamp is already at roofline.
    if nbytes < _SMALL_BYPASS_BYTES:
        return jnp.minimum(jnp.maximum(x, lo_d), hi_d)

    bounds = jnp.asarray([mn, mx], dtype=jnp.float32)

    lanes = _choose_lanes(n)
    if lanes is not None:
        # Fast path: pure reshape in, pure reshape out, no extra HBM traffic.
        x2d = jnp.reshape(x, (n // lanes, lanes))
        out2d = _clamp_2d(x2d, bounds)
        return jnp.reshape(out2d, orig_shape)

    # Ragged element count (not a multiple of 128): clamp the 128-aligned bulk
    # through the kernel and the <128-element tail with plain jnp ops -- no
    # full-tensor pad / slice round trips through HBM.
    x_flat = jnp.reshape(x, (-1,))
    bulk = (n // _LANE) * _LANE
    bulk_lanes = _choose_lanes(bulk)
    out_bulk = jnp.reshape(
        _clamp_2d(jnp.reshape(x_flat[:bulk], (bulk // bulk_lanes, bulk_lanes)), bounds),
        (-1,),
    )
    out_tail = jnp.minimum(jnp.maximum(x_flat[bulk:], lo_d), hi_d)
    return jnp.reshape(jnp.concatenate([out_bulk, out_tail]), orig_shape)


if __name__ == "__main__":
    key = jax.random.PRNGKey(0)
    k0, k1, k2, k3 = jax.random.split(key, 4)

    min_val, max_val = -0.5, 0.75

    # 1) Small NCHW activation (typical module usage) -> small-tensor bypass.
    x_small = jax.random.normal(k0, (2, 4, 16, 16), dtype=jnp.float32) * 2.0
    out = jax.block_until_ready(deephi_clamp(x_small, min=min_val, max=max_val))
    assert out.shape == x_small.shape and out.dtype == x_small.dtype
    assert jnp.allclose(out, jnp.clip(x_small, min_val, max_val))
    assert jnp.allclose(deephi_clamp(x_small, min=min_val), jnp.maximum(x_small, min_val))
    assert jnp.allclose(deephi_clamp(x_small, max=max_val), jnp.minimum(x_small, max_val))

    # 2) Larger f32 activation -> Pallas kernel path (lane-dense 2D, grid >= 2).
    x_big = jax.random.normal(k1, (8, 32, 56, 56), dtype=jnp.float32) * 2.0
    out_big = jax.block_until_ready(deephi_clamp(x_big, min=min_val, max=max_val))
    assert jnp.allclose(out_big, jnp.clip(x_big, min_val, max_val))
    out_big_min = jax.block_until_ready(deephi_clamp(x_big, min=min_val))
    assert jnp.allclose(out_big_min, jnp.maximum(x_big, min_val))

    # 3) bf16 kernel path (16-row packed sublane tiling).
    x_bf16 = (jax.random.normal(k2, (512, 768), dtype=jnp.float32) * 2.0).astype(jnp.bfloat16)
    out_bf16 = jax.block_until_ready(deephi_clamp(x_bf16, min=min_val, max=max_val))
    assert out_bf16.dtype == jnp.bfloat16
    ref_bf16 = jnp.clip(x_bf16, jnp.bfloat16(min_val), jnp.bfloat16(max_val))
    assert jnp.allclose(out_bf16, ref_bf16)

    # 4) Large ragged element count -> aligned bulk via kernel, tail via jnp.
    x_rag = jax.random.normal(k3, (517, 301), dtype=jnp.float32) * 2.0
    out_rag = jax.block_until_ready(deephi_clamp(x_rag, min=-0.1, max=0.2))
    assert out_rag.shape == x_rag.shape
    assert jnp.allclose(out_rag, jnp.clip(x_rag, -0.1, 0.2))

    print("KERNEL_OK")
</pallas_src>

<mosaic_0001>
module attributes {stable_mosaic.version = 11 : i64} {
  func.func @_clamp_kernel(%arg0: i32, %arg1: memref<2xf32, #tpu.memory_space<smem>>, %arg2: memref<392x1024xf32, #tpu.memory_space<vmem>>, %arg3: memref<392x1024xf32, #tpu.memory_space<vmem>>) attributes {dimension_semantics = [#tpu.dimension_semantics<parallel>], iteration_bounds = array<i64: 2>, scalar_prefetch = 0 : i64, scratch_operands = 0 : i64, tpu.core_type = #tpu.core_type<tc>, window_params = [{transform_indices = @transform_0, window_bounds = array<i64: 2>}, {transform_indices = @transform_1, window_bounds = array<i64: 392, 1024>}, {transform_indices = @transform_2, window_bounds = array<i64: 392, 1024>}]} {
    %c0 = arith.constant 0 : index
    %c0_0 = arith.constant 0 : index
    %0 = vector.load %arg2[%c0, %c0_0] : memref<392x1024xf32, #tpu.memory_space<vmem>>, vector<392x1024xf32>
    %c0_1 = arith.constant 0 : index
    %1 = memref.load %arg1[%c0_1] : memref<2xf32, #tpu.memory_space<smem>>
    %c1 = arith.constant 1 : index
    %2 = memref.load %arg1[%c1] : memref<2xf32, #tpu.memory_space<smem>>
    %3 = vector.broadcast %1 : f32 to vector<392x1024xf32>
    %4 = arith.maximumf %0, %3 : vector<392x1024xf32>
    %5 = vector.broadcast %2 : f32 to vector<392x1024xf32>
    %6 = arith.minimumf %4, %5 : vector<392x1024xf32>
    %c0_2 = arith.constant 0 : index
    %c0_3 = arith.constant 0 : index
    %7 = vector.load %arg3[%c0_2, %c0_3] : memref<392x1024xf32, #tpu.memory_space<vmem>>, vector<392x1024xf32>
    tpu.vector_store %arg3[%c0_2, %c0_3], %6 {strides = array<i32>} : memref<392x1024xf32, #tpu.memory_space<vmem>>, vector<392x1024xf32>,
    return
  }
  func.func @transform_0(%arg0: i32) -> i32 {
    %c0_i32 = arith.constant 0 : i32
    %c0_i32_0 = arith.constant 0 : i32
    return %c0_i32 : i32
  }
  func.func @transform_1(%arg0: i32) -> (i32, i32) {
    %c0_i32 = arith.constant 0 : i32
    %c0_i32_0 = arith.constant 0 : i32
    return %arg0, %c0_i32 : i32, i32
  }
  func.func @transform_2(%arg0: i32) -> (i32, i32) {
    %c0_i32 = arith.constant 0 : i32
    %c0_i32_0 = arith.constant 0 : i32
    return %arg0, %c0_i32 : i32, i32
  }
}

</mosaic_0001>

<llo_original>
// kernel: tpu_custom_call.1
$region0: #{tpu_custom_call.1}
  #allocation0 [shape = 'u32[]', space=smem, size = 0x4, offset = 0x4, fixed_abs, tag = 'smem constant byte address 0x4 - core index']
  #allocation1 [shape = 'u32[144,128]{1,0:T(1,128)}', space=vmem, size = 0x12000, scoped, tag = 'internal scratch']
  %s0 = inlined_call_operand.hbm [shape: f32[2], index: 0, kind: input, shape index: {}]
  %s1 = inlined_call_operand.hbm [shape: f32[784,1024], index: 1, kind: input, shape index: {}]
  %s2 = inlined_call_operand.hbm [shape: f32[784,1024], index: 2, kind: output, shape index: {}]
  %s3 = sld [smem:[#allocation0]]
  $region49: #{tpu_custom_call.1} parent=0
    _
  %s5 = ssub.s32 1, %s3
  %s6 = scalar_select 0, %s5, %s3
  $region1: #{tpu_custom_call.1} parent=0
    #allocation2 [shape = 'u8[512]{0}', space=smem, size = 0x200, scoped, tag = 'input window, operand 0, single buffered']
    #allocation3 [shape = 's32[2]{0}', space=sflag, size = 0x8, scoped, tag = 'scoped memory for tpu_custom_call.1']
    #allocation4 [shape = 's32[2]{0}', space=sflag, size = 0x8, scoped, tag = 'scoped memory for tpu_custom_call.1']
    #allocation5 [shape = 's32[2]{0}', space=sflag, size = 0x8, scoped, tag = 'scoped memory for tpu_custom_call.1']
    #allocation6 [shape = 'u8[3211264]{0}', space=vmem, size = 0x310000, scoped, tag = 'input window, operand 1']
    #allocation7 [shape = 'u8[3211264]{0}', space=vmem, size = 0x310000, scoped, tag = 'output window, operand 0']
    %7 = vsyncpa [#allocation5], 0
    %8 = vsyncpa [#allocation3], 0
    %s9 = scalar_lea.sflag [#allocation3], 1
    %10 = vsyncpa %s9, 0
    %11 = vsyncpa [#allocation4], 0
    %s12 = scalar_lea.sflag [#allocation4], 1
    %13 = vsyncpa %s12, 0
    loop: start=0, step=1, limit=4
    $region2: #{tpu_custom_call.1} parent=1 // loop_pre_header
      _
    $region3: #{tpu_custom_call.1} parent=1 // loop_header
      %s15 = sphi 0, %s19
      %p16 = scmp.ge.s32.totalorder %s15, 4
      %s23 = sphi 0, %s23
      %s25 = sphi 0, %s23
      %s26 = sphi 0, %s25
      %s40 = sphi 0, %s26
      %s46 = sphi 0, %s48
      %s49 = sphi 0, %s46
      %s50 = sphi 0, %s49
      %s66 = sphi 0, %s50
      %s72 = sphi 0, %s74
      %s75 = sphi 0, %s72
      %s76 = sphi 0, %s75
      %s92 = sphi 0, %s76
    $region4: #{tpu_custom_call.1} parent=1 // loop_header_branch
      %18 = sbr.rel (%p16) target = $region8
    $region5: #{tpu_custom_call.1} parent=1 // loop_body
      %s20 = ssub.s32 %s15, 1
      %s21 = ssub.s32 %s15, 2
      %s22 = sadd.s32 %s15, 1
      %s24 = sadd.s32 %s23, 1
      %p27 = scmp.eq.s32.totalorder %s15, 1
      %p28 = scmp.ne.s32.totalorder %s23, %s25
      %p29 = scmp.eq.s32.totalorder %s15, 0
      %p30 = por %p28, %p29
      %p31 = scmp.ne.s32.totalorder %s23, %s25
      %p32 = scmp.eq.s32.totalorder %s20, 1
      %p33 = por %p31, %p32
      %p34 = scmp.ne.s32.totalorder %s25, %s26
      %p35 = scmp.eq.s32.totalorder %s20, 0
      %p36 = por %p34, %p35
      %p37 = scmp.ne.s32.totalorder %s25, %s26
      %p38 = scmp.eq.s32.totalorder %s21, 1
      %p39 = por %p37, %p38
      %p41 = scmp.ne.s32.totalorder %s26, %s40
      %p42 = scmp.eq.s32.totalorder %s21, 0
      %p43 = por %p41, %p42
      %s44 = ssub.s32 %s15, %s22
      %p45 = scmp.eq.s32.totalorder %s44, 0
      %s47 = sadd.s32 %s46, 1
      %s48 = scalar_select %p45, %s46, %s47
      %p51 = pneg %p45
      %p52 = scmp.eq.s32.totalorder %s15, 1
      %p53 = por %p51, %p52
      %p54 = scmp.ne.s32.totalorder %s46, %s49
      %p55 = scmp.eq.s32.totalorder %s15, 0
      %p56 = por %p54, %p55
      %p57 = scmp.ne.s32.totalorder %s46, %s49
      %p58 = scmp.eq.s32.totalorder %s20, 1
      %p59 = por %p57, %p58
      %p60 = scmp.ne.s32.totalorder %s49, %s50
      %p61 = scmp.eq.s32.totalorder %s20, 0
      %p62 = por %p60, %p61
      %p63 = scmp.ne.s32.totalorder %s49, %s50
      %p64 = scmp.eq.s32.totalorder %s21, 1
      %p65 = por %p63, %p64
      %p67 = scmp.ne.s32.totalorder %s50, %s66
      %p68 = scmp.eq.s32.totalorder %s21, 0
      %p69 = por %p67, %p68
      %s70 = ssub.s32 %s15, %s22
      %p71 = scmp.eq.s32.totalorder %s70, 0
      %s73 = sadd.s32 %s72, 1
      %s74 = scalar_select %p71, %s72, %s73
      %p77 = pneg %p71
      %p78 = scmp.eq.s32.totalorder %s15, 1
      %p79 = por %p77, %p78
      %p80 = scmp.ne.s32.totalorder %s72, %s75
      %p81 = scmp.eq.s32.totalorder %s15, 0
      %p82 = por %p80, %p81
      %p83 = scmp.ne.s32.totalorder %s72, %s75
      %p84 = scmp.eq.s32.totalorder %s20, 1
      %p85 = por %p83, %p84
      %p86 = scmp.ne.s32.totalorder %s75, %s76
      %p87 = scmp.eq.s32.totalorder %s20, 0
      %p88 = por %p86, %p87
      %p89 = scmp.ne.s32.totalorder %s75, %s76
      %p90 = scmp.eq.s32.totalorder %s21, 1
      %p91 = por %p89, %p90
      %p93 = scmp.ne.s32.totalorder %s76, %s92
      %p94 = scmp.eq.s32.totalorder %s21, 0
      %p95 = por %p93, %p94
      %p96 = scmp.le.s32.totalorder 1, %s15
      %p97 = scmp.lt.s32.totalorder %s15, 3
      %p98 = pnand %p96, %p97
      %p99 = pneg %p98
      // Predicated region
      $region9: #{tpu_custom_call.1} parent=5 // pred_check
        _
      $region10: #{tpu_custom_call.1} parent=5 // pred_check_branch
        %101 = sbr.rel (%p98) target = $region12
      $region11: #{tpu_custom_call.1} parent=5 // pred_region
        %s102 = ssub.s32 %s15, 1
        // Predicated region
        $region13: #{tpu_custom_call.1} parent=11 // pred_check
          %p103 = pneg %p36
        $region14: #{tpu_custom_call.1} parent=11 // pred_check_branch
          %105 = sbr.rel (%p103) target = $region16
        $region15: #{tpu_custom_call.1} parent=11 // pred_region
          %s107 = ssub.s32 16, 16
          %108 = vsyncadd [#allocation5], %s107
          %111 = dma.hbm_to_smem %s0, 16, [#allocation2], [#allocation5]
        $region16: #{tpu_custom_call.1} parent=11 // pred_fallthru
          _
      $region12: #{tpu_custom_call.1} parent=5 // pred_fallthru
        _
      %p112 = scmp.lt.s32.totalorder %s15, 2
      // Predicated region
      $region17: #{tpu_custom_call.1} parent=5 // pred_check
        %p113 = pneg %p112
      $region18: #{tpu_custom_call.1} parent=5 // pred_check_branch
        %115 = sbr.rel (%p113) target = $region20
      $region19: #{tpu_custom_call.1} parent=5 // pred_region
        // Predicated region
        $region21: #{tpu_custom_call.1} parent=19 // pred_check
          %p116 = pneg %p56
        $region22: #{tpu_custom_call.1} parent=19 // pred_check_branch
          %118 = sbr.rel (%p116) target = $region24
        $region23: #{tpu_custom_call.1} parent=19 // pred_region
          %s119 = sand.u32 %s46, 1
          %s120 = scalar_lea.sflag [#allocation3], %s119
          %s121 = sand.u32 %s46, 1
          %s122 = smul.addr %s121, 3136
          %s123 = scalar_lea.vmem [#allocation6], %s122
          %s124 = smul.u32 49, %s15
          %s126 = ssub.s32 50176, 50176
          %127 = vsyncadd %s120, %s126
          %s128 = smul.addr %s124, 8
          %s129 = smul.addr %s128, 128
          %s130 = scalar_lea.hbm %s1, %s129
          %s131 = sshll.u32 %s123, 4
          %s132 = int_to_ptr.vmem [resolvable:$true] %s131
          %137 = dma.hbm_to_vmem [thread:$0]  %s130, 50176, %s132, %s120, 1024, 1024, 64
        $region24: #{tpu_custom_call.1} parent=19 // pred_fallthru
          _
      $region20: #{tpu_custom_call.1} parent=5 // pred_fallthru
        _
      %p138 = scmp.le.s32.totalorder 1, %s15
      %p139 = scmp.lt.s32.totalorder %s15, 3
      %p140 = pnand %p138, %p139
      %p141 = pneg %p140
      // Predicated region
      $region25: #{tpu_custom_call.1} parent=5 // pred_check
        _
      $region26: #{tpu_custom_call.1} parent=5 // pred_check_branch
        %143 = sbr.rel (%p140) target = $region28
      $region27: #{tpu_custom_call.1} parent=5 // pred_region
        %s144 = ssub.s32 %s15, 1
        // Predicated region
        $region29: #{tpu_custom_call.1} parent=27 // pred_check
          %p145 = pneg %p36
        $region30: #{tpu_custom_call.1} parent=27 // pred_check_branch
          %147 = sbr.rel (%p145) target = $region32
        $region31: #{tpu_custom_call.1} parent=27 // pred_region
          %148 = dma.done [#allocation5], 16
        $region32: #{tpu_custom_call.1} parent=27 // pred_fallthru
          _
        %s149 = sand.u32 %s49, 1
        %s150 = scalar_lea.sflag [#allocation3], %s149
        %s151 = sand.u32 %s49, 1
        %s152 = smul.addr %s151, 3136
        %s153 = scalar_lea.vmem [#allocation6], %s152
        // Predicated region
        $region33: #{tpu_custom_call.1} parent=27 // pred_check
          %p154 = pneg %p62
        $region34: #{tpu_custom_call.1} parent=27 // pred_check_branch
          %156 = sbr.rel (%p154) target = $region36
        $region35: #{tpu_custom_call.1} parent=27 // pred_region
          %157 = dma.done %s150, 50176
        $region36: #{tpu_custom_call.1} parent=27 // pred_fallthru
          _
        %158 = sfence
        %p159 = pneg %p36
        %p160 = pneg %p33
        %s161 = sand.u32 %s49, 1
        %s162 = scalar_lea.sflag [#allocation3], %s161
        %s163 = sand.u32 %s49, 1
        %s164 = smul.addr %s163, 3136
        %s165 = scalar_lea.vmem [#allocation6], %s164
        %p166 = pneg %p62
        %p167 = pneg %p59
        %p168 = pneg %p88
        %p169 = pneg %p85
        %s170 = sand.u32 %s75, 1
        %s171 = scalar_lea.sflag [#allocation4], %s170
        %s172 = sand.u32 %s75, 1
        %s173 = smul.addr %s172, 3136
        %s174 = scalar_lea.vmem [#allocation7], %s173
        %s175 = smul.u32 49, %s20
        %s176 = smul.u32 49, %s20
        %v177 = vld [vmem:[%s153] sm:$0xff]
        %v178 = vld [vmem:[%s153 + $0x8] sm:$0xff]
        %v179 = vld [vmem:[%s153 + $0x10] sm:$0xff]
        %v180 = vld [vmem:[%s153 + $0x18] sm:$0xff]
        %v181 = vld [vmem:[%s153 + $0x20] sm:$0xff]
        %v182 = vld [vmem:[%s153 + $0x28] sm:$0xff]
        %v183 = vld [vmem:[%s153 + $0x30] sm:$0xff]
        %v184 = vld [vmem:[%s153 + $0x38] sm:$0xff]
        %v185 = vld [vmem:[%s153 + $0x40] sm:$0xff]
        %v186 = vld [vmem:[%s153 + $0x48] sm:$0xff]
        %v187 = vld [vmem:[%s153 + $0x50] sm:$0xff]
        %v188 = vld [vmem:[%s153 + $0x58] sm:$0xff]
        %v189 = vld [vmem:[%s153 + $0x60] sm:$0xff]
        %v190 = vld [vmem:[%s153 + $0x68] sm:$0xff]
        %v191 = vld [vmem:[%s153 + $0x70] sm:$0xff]
        %v192 = vld [vmem:[%s153 + $0x78] sm:$0xff]
        %v193 = vld [vmem:[%s153 + $0x80] sm:$0xff]
        %v194 = vld [vmem:[%s153 + $0x88] sm:$0xff]
        %v195 = vld [vmem:[%s153 + $0x90] sm:$0xff]
        %v196 = vld [vmem:[%s153 + $0x98] sm:$0xff]
        %v197 = vld [vmem:[%s153 + $0xa0] sm:$0xff]
        %v198 = vld [vmem:[%s153 + $0xa8] sm:$0xff]
        %v199 = vld [vmem:[%s153 + $0xb0] sm:$0xff]
        %v200 = vld [vmem:[%s153 + $0xb8] sm:$0xff]
        %v201 = vld [vmem:[%s153 + $0xc0] sm:$0xff]
        %v202 = vld [vmem:[%s153 + $0xc8] sm:$0xff]
        %v203 = vld [vmem:[%s153 + $0xd0] sm:$0xff]
        %v204 = vld [vmem:[%s153 + $0xd8] sm:$0xff]
        %v205 = vld [vmem:[%s153 + $0xe0] sm:$0xff]
        %v206 = vld [vmem:[%s153 + $0xe8] sm:$0xff]
        %v207 = vld [vmem:[%s153 + $0xf0] sm:$0xff]
        %v208 = vld [vmem:[%s153 + $0xf8] sm:$0xff]
        %v209 = vld [vmem:[%s153 + $0x100] sm:$0xff]
        %v210 = vld [vmem:[%s153 + $0x108] sm:$0xff]
        %v211 = vld [vmem:[%s153 + $0x110] sm:$0xff]
        %v212 = vld [vmem:[%s153 + $0x118] sm:$0xff]
        %v213 = vld [vmem:[%s153 + $0x120] sm:$0xff]
        %v214 = vld [vmem:[%s153 + $0x128] sm:$0xff]
        %v215 = vld [vmem:[%s153 + $0x130] sm:$0xff]
        %v216 = vld [vmem:[%s153 + $0x138] sm:$0xff]
        %v217 = vld [vmem:[%s153 + $0x140] sm:$0xff]
        %v218 = vld [vmem:[%s153 + $0x148] sm:$0xff]
        %v219 = vld [vmem:[%s153 + $0x150] sm:$0xff]
        %v220 = vld [vmem:[%s153 + $0x158] sm:$0xff]
        %v221 = vld [vmem:[%s153 + $0x160] sm:$0xff]
        %v222 = vld [vmem:[%s153 + $0x168] sm:$0xff]
        %v223 = vld [vmem:[%s153 + $0x170] sm:$0xff]
        %v224 = vld [vmem:[%s153 + $0x178] sm:$0xff]
        %v225 = vld [vmem:[%s153 + $0x180] sm:$0xff]
        %v226 = vld [vmem:[%s153 + $0x188] sm:$0xff]
        %v227 = vld [vmem:[%s153 + $0x190] sm:$0xff]
        %v228 = vld [vmem:[%s153 + $0x198] sm:$0xff]
        %v229 = vld [vmem:[%s153 + $0x1a0] sm:$0xff]
        %v230 = vld [vmem:[%s153 + $0x1a8] sm:$0xff]
        %v231 = vld [vmem:[%s153 + $0x1b0] sm:$0xff]
        %v232 = vld [vmem:[%s153 + $0x1b8] sm:$0xff]
        %v233 = vld [vmem:[%s153 + $0x1c0] sm:$0xff]
        %v234 = vld [vmem:[%s153 + $0x1c8] sm:$0xff]
        %v235 = vld [vmem:[%s153 + $0x1d0] sm:$0xff]
        %v236 = vld [vmem:[%s153 + $0x1d8] sm:$0xff]
        %v237 = vld [vmem:[%s153 + $0x1e0] sm:$0xff]
        %v238 = vld [vmem:[%s153 + $0x1e8] sm:$0xff]
        %v239 = vld [vmem:[%s153 + $0x1f0] sm:$0xff]
        %v240 = vld [vmem:[%s153 + $0x1f8] sm:$0xff]
        %v241 = vld [vmem:[%s153 + $0x200] sm:$0xff]
        %v242 = vld [vmem:[%s153 + $0x208] sm:$0xff]
        %v243 = vld [vmem:[%s153 + $0x210] sm:$0xff]
        %v244 = vld [vmem:[%s153 + $0x218] sm:$0xff]
        %v245 = vld [vmem:[%s153 + $0x220] sm:$0xff]
        %v246 = vld [vmem:[%s153 + $0x228] sm:$0xff]
        %v247 = vld [vmem:[%s153 + $0x230] sm:$0xff]
        %v248 = vld [vmem:[%s153 + $0x238] sm:$0xff]
        %v249 = vld [vmem:[%s153 + $0x240] sm:$0xff]
        %v250 = vld [vmem:[%s153 + $0x248] sm:$0xff]
        %v251 = vld [vmem:[%s153 + $0x250] sm:$0xff]
        %v252 = vld [vmem:[%s153 + $0x258] sm:$0xff]
        %v253 = vld [vmem:[%s153 + $0x260] sm:$0xff]
        %v254 = vld [vmem:[%s153 + $0x268] sm:$0xff]
        %v255 = vld [vmem:[%s153 + $0x270] sm:$0xff]
        %v256 = vld [vmem:[%s153 + $0x278] sm:$0xff]
        %v257 = vld [vmem:[%s153 + $0x280] sm:$0xff]
        %v258 = vld [vmem:[%s153 + $0x288] sm:$0xff]
        %v259 = vld [vmem:[%s153 + $0x290] sm:$0xff]
        %v260 = vld [vmem:[%s153 + $0x298] sm:$0xff]
        %v261 = vld [vmem:[%s153 + $0x2a0] sm:$0xff]
        %v262 = vld [vmem:[%s153 + $0x2a8] sm:$0xff]
        %v263 = vld [vmem:[%s153 + $0x2b0] sm:$0xff]
        %v264 = vld [vmem:[%s153 + $0x2b8] sm:$0xff]
        %v265 = vld [vmem:[%s153 + $0x2c0] sm:$0xff]
        %v266 = vld [vmem:[%s153 + $0x2c8] sm:$0xff]
        %v267 = vld [vmem:[%s153 + $0x2d0] sm:$0xff]
        %v268 = vld [vmem:[%s153 + $0x2d8] sm:$0xff]
        %v269 = vld [vmem:[%s153 + $0x2e0] sm:$0xff]
        %v270 = vld [vmem:[%s153 + $0x2e8] sm:$0xff]
        %v271 = vld [vmem:[%s153 + $0x2f0] sm:$0xff]
        %v272 = vld [vmem:[%s153 + $0x2f8] sm:$0xff]
        %v273 = vld [vmem:[%s153 + $0x300] sm:$0xff]
        %v274 = vld [vmem:[%s153 + $0x308] sm:$0xff]
        %v275 = vld [vmem:[%s153 + $0x310] sm:$0xff]
        %v276 = vld [vmem:[%s153 + $0x318] sm:$0xff]
        %v277 = vld [vmem:[%s153 + $0x320] sm:$0xff]
        %v278 = vld [vmem:[%s153 + $0x328] sm:$0xff]
        %v279 = vld [vmem:[%s153 + $0x330] sm:$0xff]
        %v280 = vld [vmem:[%s153 + $0x338] sm:$0xff]
        %v281 = vld [vmem:[%s153 + $0x340] sm:$0xff]
        %v282 = vld [vmem:[%s153 + $0x348] sm:$0xff]
        %v283 = vld [vmem:[%s153 + $0x350] sm:$0xff]
        %v284 = vld [vmem:[%s153 + $0x358] sm:$0xff]
        %v285 = vld [vmem:[%s153 + $0x360] sm:$0xff]
        %v286 = vld [vmem:[%s153 + $0x368] sm:$0xff]
        %v287 = vld [vmem:[%s153 + $0x370] sm:$0xff]
        %v288 = vld [vmem:[%s153 + $0x378] sm:$0xff]
        %v289 = vld [vmem:[%s153 + $0x380] sm:$0xff]
        %v290 = vld [vmem:[%s153 + $0x388] sm:$0xff]
        %v291 = vld [vmem:[%s153 + $0x390] sm:$0xff]
        %v292 = vld [vmem:[%s153 + $0x398] sm:$0xff]
        %v293 = vld [vmem:[%s153 + $0x3a0] sm:$0xff]
        %v294 = vld [vmem:[%s153 + $0x3a8] sm:$0xff]
        %v295 = vld [vmem:[%s153 + $0x3b0] sm:$0xff]
        %v296 = vld [vmem:[%s153 + $0x3b8] sm:$0xff]
        %v297 = vld [vmem:[%s153 + $0x3c0] sm:$0xff]
        %v298 = vld [vmem:[%s153 + $0x3c8] sm:$0xff]
        %v299 = vld [vmem:[%s153 + $0x3d0] sm:$0xff]
        %v300 = vld [vmem:[%s153 + $0x3d8] sm:$0xff]
        %v301 = vld [vmem:[%s153 + $0x3e0] sm:$0xff]
        %v302 = vld [vmem:[%s153 + $0x3e8] sm:$0xff]
        %v303 = vld [vmem:[%s153 + $0x3f0] sm:$0xff]
        %v304 = vld [vmem:[%s153 + $0x3f8] sm:$0xff]
        %v305 = vld [vmem:[%s153 + $0x400] sm:$0xff]
        %v306 = vld [vmem:[%s153 + $0x408] sm:$0xff]
        %v307 = vld [vmem:[%s153 + $0x410] sm:$0xff]
        %v308 = vld [vmem:[%s153 + $0x418] sm:$0xff]
        %v309 = vld [vmem:[%s153 + $0x420] sm:$0xff]
        %v310 = vld [vmem:[%s153 + $0x428] sm:$0xff]
        %v311 = vld [vmem:[%s153 + $0x430] sm:$0xff]
        %v312 = vld [vmem:[%s153 + $0x438] sm:$0xff]
        %v313 = vld [vmem:[%s153 + $0x440] sm:$0xff]
        %v314 = vld [vmem:[%s153 + $0x448] sm:$0xff]
        %v315 = vld [vmem:[%s153 + $0x450] sm:$0xff]
        %v316 = vld [vmem:[%s153 + $0x458] sm:$0xff]
        %v317 = vld [vmem:[%s153 + $0x460] sm:$0xff]
        %v318 = vld [vmem:[%s153 + $0x468] sm:$0xff]
        %v319 = vld [vmem:[%s153 + $0x470] sm:$0xff]
        %v320 = vld [vmem:[%s153 + $0x478] sm:$0xff]
        %v321 = vld [vmem:[%s153 + $0x480] sm:$0xff]
        %v322 = vld [vmem:[%s153 + $0x488] sm:$0xff]
        %v323 = vld [vmem:[%s153 + $0x490] sm:$0xff]
        %v324 = vld [vmem:[%s153 + $0x498] sm:$0xff]
        %v325 = vld [vmem:[%s153 + $0x4a0] sm:$0xff]
        %v326 = vld [vmem:[%s153 + $0x4a8] sm:$0xff]
        %v327 = vld [vmem:[%s153 + $0x4b0] sm:$0xff]
        %v328 = vld [vmem:[%s153 + $0x4b8] sm:$0xff]
        %v329 = vld [vmem:[%s153 + $0x4c0] sm:$0xff]
        %v330 = vld [vmem:[%s153 + $0x4c8] sm:$0xff]
        %v331 = vld [vmem:[%s153 + $0x4d0] sm:$0xff]
        %v332 = vld [vmem:[%s153 + $0x4d8] sm:$0xff]
        %v333 = vld [vmem:[%s153 + $0x4e0] sm:$0xff]
        %v334 = vld [vmem:[%s153 + $0x4e8] sm:$0xff]
        %v335 = vld [vmem:[%s153 + $0x4f0] sm:$0xff]
        %v336 = vld [vmem:[%s153 + $0x4f8] sm:$0xff]
        %v337 = vld [vmem:[%s153 + $0x500] sm:$0xff]
        %v338 = vld [vmem:[%s153 + $0x508] sm:$0xff]
        %v339 = vld [vmem:[%s153 + $0x510] sm:$0xff]
        %v340 = vld [vmem:[%s153 + $0x518] sm:$0xff]
        %v341 = vld [vmem:[%s153 + $0x520] sm:$0xff]
        %v342 = vld [vmem:[%s153 + $0x528] sm:$0xff]
        %v343 = vld [vmem:[%s153 + $0x530] sm:$0xff]
        %v344 = vld [vmem:[%s153 + $0x538] sm:$0xff]
        %v345 = vld [vmem:[%s153 + $0x540] sm:$0xff]
        %v346 = vld [vmem:[%s153 + $0x548] sm:$0xff]
        %v347 = vld [vmem:[%s153 + $0x550] sm:$0xff]
        %v348 = vld [vmem:[%s153 + $0x558] sm:$0xff]
        %v349 = vld [vmem:[%s153 + $0x560] sm:$0xff]
        %v350 = vld [vmem:[%s153 + $0x568] sm:$0xff]
        %v351 = vld [vmem:[%s153 + $0x570] sm:$0xff]
        %v352 = vld [vmem:[%s153 + $0x578] sm:$0xff]
        %v353 = vld [vmem:[%s153 + $0x580] sm:$0xff]
        %v354 = vld [vmem:[%s153 + $0x588] sm:$0xff]
        %v355 = vld [vmem:[%s153 + $0x590] sm:$0xff]
        %v356 = vld [vmem:[%s153 + $0x598] sm:$0xff]
        %v357 = vld [vmem:[%s153 + $0x5a0] sm:$0xff]
        %v358 = vld [vmem:[%s153 + $0x5a8] sm:$0xff]
        %v359 = vld [vmem:[%s153 + $0x5b0] sm:$0xff]
        %v360 = vld [vmem:[%s153 + $0x5b8] sm:$0xff]
        %v361 = vld [vmem:[%s153 + $0x5c0] sm:$0xff]
        %v362 = vld [vmem:[%s153 + $0x5c8] sm:$0xff]
        %v363 = vld [vmem:[%s153 + $0x5d0] sm:$0xff]
        %v364 = vld [vmem:[%s153 + $0x5d8] sm:$0xff]
        %v365 = vld [vmem:[%s153 + $0x5e0] sm:$0xff]
        %v366 = vld [vmem:[%s153 + $0x5e8] sm:$0xff]
        %v367 = vld [vmem:[%s153 + $0x5f0] sm:$0xff]
        %v368 = vld [vmem:[%s153 + $0x5f8] sm:$0xff]
        %v369 = vld [vmem:[%s153 + $0x600] sm:$0xff]
        %v370 = vld [vmem:[%s153 + $0x608] sm:$0xff]
        %v371 = vld [vmem:[%s153 + $0x610] sm:$0xff]
        %v372 = vld [vmem:[%s153 + $0x618] sm:$0xff]
        %v373 = vld [vmem:[%s153 + $0x620] sm:$0xff]
        %v374 = vld [vmem:[%s153 + $0x628] sm:$0xff]
        %v375 = vld [vmem:[%s153 + $0x630] sm:$0xff]
        %v376 = vld [vmem:[%s153 + $0x638] sm:$0xff]
        %v377 = vld [vmem:[%s153 + $0x640] sm:$0xff]
        %v378 = vld [vmem:[%s153 + $0x648] sm:$0xff]
        %v379 = vld [vmem:[%s153 + $0x650] sm:$0xff]
        %v380 = vld [vmem:[%s153 + $0x658] sm:$0xff]
        %v381 = vld [vmem:[%s153 + $0x660] sm:$0xff]
        %v382 = vld [vmem:[%s153 + $0x668] sm:$0xff]
        %v383 = vld [vmem:[%s153 + $0x670] sm:$0xff]
        %v384 = vld [vmem:[%s153 + $0x678] sm:$0xff]
        %v385 = vld [vmem:[%s153 + $0x680] sm:$0xff]
        %v386 = vld [vmem:[%s153 + $0x688] sm:$0xff]
        %v387 = vld [vmem:[%s153 + $0x690] sm:$0xff]
        %v388 = vld [vmem:[%s153 + $0x698] sm:$0xff]
        %v389 = vld [vmem:[%s153 + $0x6a0] sm:$0xff]
        %v390 = vld [vmem:[%s153 + $0x6a8] sm:$0xff]
        %v391 = vld [vmem:[%s153 + $0x6b0] sm:$0xff]
        %v392 = vld [vmem:[%s153 + $0x6b8] sm:$0xff]
        %v393 = vld [vmem:[%s153 + $0x6c0] sm:$0xff]
        %v394 = vld [vmem:[%s153 + $0x6c8] sm:$0xff]
        %v395 = vld [vmem:[%s153 + $0x6d0] sm:$0xff]
        %v396 = vld [vmem:[%s153 + $0x6d8] sm:$0xff]
        %v397 = vld [vmem:[%s153 + $0x6e0] sm:$0xff]
        %v398 = vld [vmem:[%s153 + $0x6e8] sm:$0xff]
        %v399 = vld [vmem:[%s153 + $0x6f0] sm:$0xff]
        %v400 = vld [vmem:[%s153 + $0x6f8] sm:$0xff]
        %v401 = vld [vmem:[%s153 + $0x700] sm:$0xff]
        %v402 = vld [vmem:[%s153 + $0x708] sm:$0xff]
        %v403 = vld [vmem:[%s153 + $0x710] sm:$0xff]
        %v404 = vld [vmem:[%s153 + $0x718] sm:$0xff]
        %v405 = vld [vmem:[%s153 + $0x720] sm:$0xff]
        %v406 = vld [vmem:[%s153 + $0x728] sm:$0xff]
        %v407 = vld [vmem:[%s153 + $0x730] sm:$0xff]
        %v408 = vld [vmem:[%s153 + $0x738] sm:$0xff]
        %v409 = vld [vmem:[%s153 + $0x740] sm:$0xff]
        %v410 = vld [vmem:[%s153 + $0x748] sm:$0xff]
        %v411 = vld [vmem:[%s153 + $0x750] sm:$0xff]
        %v412 = vld [vmem:[%s153 + $0x758] sm:$0xff]
        %v413 = vld [vmem:[%s153 + $0x760] sm:$0xff]
        %v414 = vld [vmem:[%s153 + $0x768] sm:$0xff]
        %v415 = vld [vmem:[%s153 + $0x770] sm:$0xff]
        %v416 = vld [vmem:[%s153 + $0x778] sm:$0xff]
        %v417 = vld [vmem:[%s153 + $0x780] sm:$0xff]
        %v418 = vld [vmem:[%s153 + $0x788] sm:$0xff]
        %v419 = vld [vmem:[%s153 + $0x790] sm:$0xff]
        %v420 = vld [vmem:[%s153 + $0x798] sm:$0xff]
        %v421 = vld [vmem:[%s153 + $0x7a0] sm:$0xff]
        %v422 = vld [vmem:[%s153 + $0x7a8] sm:$0xff]
        %v423 = vld [vmem:[%s153 + $0x7b0] sm:$0xff]
        %v424 = vld [vmem:[%s153 + $0x7b8] sm:$0xff]
        %v425 = vld [vmem:[%s153 + $0x7c0] sm:$0xff]
        %v426 = vld [vmem:[%s153 + $0x7c8] sm:$0xff]
        %v427 = vld [vmem:[%s153 + $0x7d0] sm:$0xff]
        %v428 = vld [vmem:[%s153 + $0x7d8] sm:$0xff]
        %v429 = vld [vmem:[%s153 + $0x7e0] sm:$0xff]
        %v430 = vld [vmem:[%s153 + $0x7e8] sm:$0xff]
        %v431 = vld [vmem:[%s153 + $0x7f0] sm:$0xff]
        %v432 = vld [vmem:[%s153 + $0x7f8] sm:$0xff]
        %v433 = vld [vmem:[%s153 + $0x800] sm:$0xff]
        %v434 = vld [vmem:[%s153 + $0x808] sm:$0xff]
        %v435 = vld [vmem:[%s153 + $0x810] sm:$0xff]
        %v436 = vld [vmem:[%s153 + $0x818] sm:$0xff]
        %v437 = vld [vmem:[%s153 + $0x820] sm:$0xff]
        %v438 = vld [vmem:[%s153 + $0x828] sm:$0xff]
        %v439 = vld [vmem:[%s153 + $0x830] sm:$0xff]
        %v440 = vld [vmem:[%s153 + $0x838] sm:$0xff]
        %v441 = vld [vmem:[%s153 + $0x840] sm:$0xff]
        %v442 = vld [vmem:[%s153 + $0x848] sm:$0xff]
        %v443 = vld [vmem:[%s153 + $0x850] sm:$0xff]
        %v444 = vld [vmem:[%s153 + $0x858] sm:$0xff]
        %v445 = vld [vmem:[%s153 + $0x860] sm:$0xff]
        %v446 = vld [vmem:[%s153 + $0x868] sm:$0xff]
        %v447 = vld [vmem:[%s153 + $0x870] sm:$0xff]
        %v448 = vld [vmem:[%s153 + $0x878] sm:$0xff]
        %v449 = vld [vmem:[%s153 + $0x880] sm:$0xff]
        %v450 = vld [vmem:[%s153 + $0x888] sm:$0xff]
        %v451 = vld [vmem:[%s153 + $0x890] sm:$0xff]
        %v452 = vld [vmem:[%s153 + $0x898] sm:$0xff]
        %v453 = vld [vmem:[%s153 + $0x8a0] sm:$0xff]
        %v454 = vld [vmem:[%s153 + $0x8a8] sm:$0xff]
        %v455 = vld [vmem:[%s153 + $0x8b0] sm:$0xff]
        %v456 = vld [vmem:[%s153 + $0x8b8] sm:$0xff]
        %v457 = vld [vmem:[%s153 + $0x8c0] sm:$0xff]
        %v458 = vld [vmem:[%s153 + $0x8c8] sm:$0xff]
        %v459 = vld [vmem:[%s153 + $0x8d0] sm:$0xff]
        %v460 = vld [vmem:[%s153 + $0x8d8] sm:$0xff]
        %v461 = vld [vmem:[%s153 + $0x8e0] sm:$0xff]
        %v462 = vld [vmem:[%s153 + $0x8e8] sm:$0xff]
        %v463 = vld [vmem:[%s153 + $0x8f0] sm:$0xff]
        %v464 = vld [vmem:[%s153 + $0x8f8] sm:$0xff]
        %v465 = vld [vmem:[%s153 + $0x900] sm:$0xff]
        %v466 = vld [vmem:[%s153 + $0x908] sm:$0xff]
        %v467 = vld [vmem:[%s153 + $0x910] sm:$0xff]
        %v468 = vld [vmem:[%s153 + $0x918] sm:$0xff]
        %v469 = vld [vmem:[%s153 + $0x920] sm:$0xff]
        %v470 = vld [vmem:[%s153 + $0x928] sm:$0xff]
        %v471 = vld [vmem:[%s153 + $0x930] sm:$0xff]
        %v472 = vld [vmem:[%s153 + $0x938] sm:$0xff]
        %v473 = vld [vmem:[%s153 + $0x940] sm:$0xff]
        %v474 = vld [vmem:[%s153 + $0x948] sm:$0xff]
        %v475 = vld [vmem:[%s153 + $0x950] sm:$0xff]
        %v476 = vld [vmem:[%s153 + $0x958] sm:$0xff]
        %v477 = vld [vmem:[%s153 + $0x960] sm:$0xff]
        %v478 = vld [vmem:[%s153 + $0x968] sm:$0xff]
        %v479 = vld [vmem:[%s153 + $0x970] sm:$0xff]
        %v480 = vld [vmem:[%s153 + $0x978] sm:$0xff]
        %v481 = vld [vmem:[%s153 + $0x980] sm:$0xff]
        %v482 = vld [vmem:[%s153 + $0x988] sm:$0xff]
        %v483 = vld [vmem:[%s153 + $0x990] sm:$0xff]
        %v484 = vld [vmem:[%s153 + $0x998] sm:$0xff]
        %v485 = vld [vmem:[%s153 + $0x9a0] sm:$0xff]
        %v486 = vld [vmem:[%s153 + $0x9a8] sm:$0xff]
        %v487 = vld [vmem:[%s153 + $0x9b0] sm:$0xff]
        %v488 = vld [vmem:[%s153 + $0x9b8] sm:$0xff]
        %v489 = vld [vmem:[%s153 + $0x9c0] sm:$0xff]
        %v490 = vld [vmem:[%s153 + $0x9c8] sm:$0xff]
        %v491 = vld [vmem:[%s153 + $0x9d0] sm:$0xff]
        %v492 = vld [vmem:[%s153 + $0x9d8] sm:$0xff]
        %v493 = vld [vmem:[%s153 + $0x9e0] sm:$0xff]
        %v494 = vld [vmem:[%s153 + $0x9e8] sm:$0xff]
        %v495 = vld [vmem:[%s153 + $0x9f0] sm:$0xff]
        %v496 = vld [vmem:[%s153 + $0x9f8] sm:$0xff]
        %v497 = vld [vmem:[%s153 + $0xa00] sm:$0xff]
        %v498 = vld [vmem:[%s153 + $0xa08] sm:$0xff]
        %v499 = vld [vmem:[%s153 + $0xa10] sm:$0xff]
        %v500 = vld [vmem:[%s153 + $0xa18] sm:$0xff]
        %v501 = vld [vmem:[%s153 + $0xa20] sm:$0xff]
        %v502 = vld [vmem:[%s153 + $0xa28] sm:$0xff]
        %v503 = vld [vmem:[%s153 + $0xa30] sm:$0xff]
        %v504 = vld [vmem:[%s153 + $0xa38] sm:$0xff]
        %v505 = vld [vmem:[%s153 + $0xa40] sm:$0xff]
        %v506 = vld [vmem:[%s153 + $0xa48] sm:$0xff]
        %v507 = vld [vmem:[%s153 + $0xa50] sm:$0xff]
        %v508 = vld [vmem:[%s153 + $0xa58] sm:$0xff]
        %v509 = vld [vmem:[%s153 + $0xa60] sm:$0xff]
        %v510 = vld [vmem:[%s153 + $0xa68] sm:$0xff]
        %v511 = vld [vmem:[%s153 + $0xa70] sm:$0xff]
        %v512 = vld [vmem:[%s153 + $0xa78] sm:$0xff]
        %v513 = vld [vmem:[%s153 + $0xa80] sm:$0xff]
        %v514 = vld [vmem:[%s153 + $0xa88] sm:$0xff]
        %v515 = vld [vmem:[%s153 + $0xa90] sm:$0xff]
        %v516 = vld [vmem:[%s153 + $0xa98] sm:$0xff]
        %v517 = vld [vmem:[%s153 + $0xaa0] sm:$0xff]
        %v518 = vld [vmem:[%s153 + $0xaa8] sm:$0xff]
        %v519 = vld [vmem:[%s153 + $0xab0] sm:$0xff]
        %v520 = vld [vmem:[%s153 + $0xab8] sm:$0xff]
        %v521 = vld [vmem:[%s153 + $0xac0] sm:$0xff]
        %v522 = vld [vmem:[%s153 + $0xac8] sm:$0xff]
        %v523 = vld [vmem:[%s153 + $0xad0] sm:$0xff]
        %v524 = vld [vmem:[%s153 + $0xad8] sm:$0xff]
        %v525 = vld [vmem:[%s153 + $0xae0] sm:$0xff]
        %v526 = vld [vmem:[%s153 + $0xae8] sm:$0xff]
        %v527 = vld [vmem:[%s153 + $0xaf0] sm:$0xff]
        %v528 = vld [vmem:[%s153 + $0xaf8] sm:$0xff]
        %v529 = vld [vmem:[%s153 + $0xb00] sm:$0xff]
        %v530 = vld [vmem:[%s153 + $0xb08] sm:$0xff]
        %v531 = vld [vmem:[%s153 + $0xb10] sm:$0xff]
        %v532 = vld [vmem:[%s153 + $0xb18] sm:$0xff]
        %v533 = vld [vmem:[%s153 + $0xb20] sm:$0xff]
        %v534 = vld [vmem:[%s153 + $0xb28] sm:$0xff]
        %v535 = vld [vmem:[%s153 + $0xb30] sm:$0xff]
        %v536 = vld [vmem:[%s153 + $0xb38] sm:$0xff]
        %v537 = vld [vmem:[%s153 + $0xb40] sm:$0xff]
        %v538 = vld [vmem:[%s153 + $0xb48] sm:$0xff]
        %v539 = vld [vmem:[%s153 + $0xb50] sm:$0xff]
        %v540 = vld [vmem:[%s153 + $0xb58] sm:$0xff]
        %v541 = vld [vmem:[%s153 + $0xb60] sm:$0xff]
        %v542 = vld [vmem:[%s153 + $0xb68] sm:$0xff]
        %v543 = vld [vmem:[%s153 + $0xb70] sm:$0xff]
        %v544 = vld [vmem:[%s153 + $0xb78] sm:$0xff]
        %v545 = vld [vmem:[%s153 + $0xb80] sm:$0xff]
        %v546 = vld [vmem:[%s153 + $0xb88] sm:$0xff]
        %v547 = vld [vmem:[%s153 + $0xb90] sm:$0xff]
        %v548 = vld [vmem:[%s153 + $0xb98] sm:$0xff]
        %v549 = vld [vmem:[%s153 + $0xba0] sm:$0xff]
        %v550 = vld [vmem:[%s153 + $0xba8] sm:$0xff]
        %v551 = vld [vmem:[%s153 + $0xbb0] sm:$0xff]
        %v552 = vld [vmem:[%s153 + $0xbb8] sm:$0xff]
        %v553 = vld [vmem:[%s153 + $0xbc0] sm:$0xff]
        %v554 = vld [vmem:[%s153 + $0xbc8] sm:$0xff]
        %v555 = vld [vmem:[%s153 + $0xbd0] sm:$0xff]
        %v556 = vld [vmem:[%s153 + $0xbd8] sm:$0xff]
        %v557 = vld [vmem:[%s153 + $0xbe0] sm:$0xff]
        %v558 = vld [vmem:[%s153 + $0xbe8] sm:$0xff]
        %v559 = vld [vmem:[%s153 + $0xbf0] sm:$0xff]
        %v560 = vld [vmem:[%s153 + $0xbf8] sm:$0xff]
        %v561 = vld [vmem:[%s153 + $0xc00] sm:$0xff]
        %v562 = vld [vmem:[%s153 + $0xc08] sm:$0xff]
        %v563 = vld [vmem:[%s153 + $0xc10] sm:$0xff]
        %v564 = vld [vmem:[%s153 + $0xc18] sm:$0xff]
        %v565 = vld [vmem:[%s153 + $0xc20] sm:$0xff]
        %v566 = vld [vmem:[%s153 + $0xc28] sm:$0xff]
        %v567 = vld [vmem:[%s153 + $0xc30] sm:$0xff]
        %v568 = vld [vmem:[%s153 + $0xc38] sm:$0xff]
        %s569 = sld [smem:[#allocation2]]
        %s570 = sld [smem:[#allocation2 + $0x1]]
        %v571 = vstv %s569
        %v572 = vmax.f32 %v177, %v571
        %v573 = vmax.f32 %v178, %v571
        %v574 = vmax.f32 %v179, %v571
        %v575 = vmax.f32 %v180, %v571
        %v576 = vmax.f32 %v181, %v571
        %v577 = vmax.f32 %v182, %v571
        %v578 = vmax.f32 %v183, %v571
        %v579 = vmax.f32 %v184, %v571
        %v580 = vmax.f32 %v185, %v571
        %v581 = vmax.f32 %v186, %v571
        %v582 = vmax.f32 %v187, %v571
        %v583 = vmax.f32 %v188, %v571
        %v584 = vmax.f32 %v189, %v571
        %v585 = vmax.f32 %v190, %v571
        %v586 = vmax.f32 %v191, %v571
        %v587 = vmax.f32 %v192, %v571
        %v588 = vmax.f32 %v193, %v571
        %v589 = vmax.f32 %v194, %v571
        %v590 = vmax.f32 %v195, %v571
        %v591 = vmax.f32 %v196, %v571
        %v592 = vmax.f32 %v197, %v571
        %v593 = vmax.f32 %v198, %v571
        %v594 = vmax.f32 %v199, %v571
        %v595 = vmax.f32 %v200, %v571
        %v596 = vmax.f32 %v201, %v571
        %v597 = vmax.f32 %v202, %v571
        %v598 = vmax.f32 %v203, %v571
        %v599 = vmax.f32 %v204, %v571
        %v600 = vmax.f32 %v205, %v571
        %v601 = vmax.f32 %v206, %v571
        %v602 = vmax.f32 %v207, %v571
        %v603 = vmax.f32 %v208, %v571
        %v604 = vmax.f32 %v209, %v571
        %v605 = vmax.f32 %v210, %v571
        %v606 = vmax.f32 %v211, %v571
        %v607 = vmax.f32 %v212, %v571
        %v608 = vmax.f32 %v213, %v571
        %v609 = vmax.f32 %v214, %v571
        %v610 = vmax.f32 %v215, %v571
        %v611 = vmax.f32 %v216, %v571
        %v612 = vmax.f32 %v217, %v571
        %v613 = vmax.f32 %v218, %v571
        %v614 = vmax.f32 %v219, %v571
        %v615 = vmax.f32 %v220, %v571
        %v616 = vmax.f32 %v221, %v571
        %v617 = vmax.f32 %v222, %v571
        %v618 = vmax.f32 %v223, %v571
        %v619 = vmax.f32 %v224, %v571
        %v620 = vmax.f32 %v225, %v571
        %v621 = vmax.f32 %v226, %v571
        %v622 = vmax.f32 %v227, %v571
        %v623 = vmax.f32 %v228, %v571
        %v624 = vmax.f32 %v229, %v571
        %v625 = vmax.f32 %v230, %v571
        %v626 = vmax.f32 %v231, %v571
        %v627 = vmax.f32 %v232, %v571
        %v628 = vmax.f32 %v233, %v571
        %v629 = vmax.f32 %v234, %v571
        %v630 = vmax.f32 %v235, %v571
        %v631 = vmax.f32 %v236, %v571
        %v632 = vmax.f32 %v237, %v571
        %v633 = vmax.f32 %v238, %v571
        %v634 = vmax.f32 %v239, %v571
        %v635 = vmax.f32 %v240, %v571
        %v636 = vmax.f32 %v241, %v571
        %v637 = vmax.f32 %v242, %v571
        %v638 = vmax.f32 %v243, %v571
        %v639 = vmax.f32 %v244, %v571
        %v640 = vmax.f32 %v245, %v571
        %v641 = vmax.f32 %v246, %v571
        %v642 = vmax.f32 %v247, %v571
        %v643 = vmax.f32 %v248, %v571
        %v644 = vmax.f32 %v249, %v571
        %v645 = vmax.f32 %v250, %v571
        %v646 = vmax.f32 %v251, %v571
        %v647 = vmax.f32 %v252, %v571
        %v648 = vmax.f32 %v253, %v571
        %v649 = vmax.f32 %v254, %v571
        %v650 = vmax.f32 %v255, %v571
        %v651 = vmax.f32 %v256, %v571
        %v652 = vmax.f32 %v257, %v571
        %v653 = vmax.f32 %v258, %v571
        %v654 = vmax.f32 %v259, %v571
        %v655 = vmax.f32 %v260, %v571
        %v656 = vmax.f32 %v261, %v571
        %v657 = vmax.f32 %v262, %v571
        %v658 = vmax.f32 %v263, %v571
        %v659 = vmax.f32 %v264, %v571
        %v660 = vmax.f32 %v265, %v571
        %v661 = vmax.f32 %v266, %v571
        %v662 = vmax.f32 %v267, %v571
        %v663 = vmax.f32 %v268, %v571
        %v664 = vmax.f32 %v269, %v571
        %v665 = vmax.f32 %v270, %v571
        %v666 = vmax.f32 %v271, %v571
        %v667 = vmax.f32 %v272, %v571
        %v668 = vmax.f32 %v273, %v571
        %v669 = vmax.f32 %v274, %v571
        %v670 = vmax.f32 %v275, %v571
        %v671 = vmax.f32 %v276, %v571
        %v672 = vmax.f32 %v277, %v571
        %v673 = vmax.f32 %v278, %v571
        %v674 = vmax.f32 %v279, %v571
        %v675 = vmax.f32 %v280, %v571
        %v676 = vmax.f32 %v281, %v571
        %v677 = vmax.f32 %v282, %v571
        %v678 = vmax.f32 %v283, %v571
        %v679 = vmax.f32 %v284, %v571
        %v680 = vmax.f32 %v285, %v571
        %v681 = vmax.f32 %v286, %v571
        %v682 = vmax.f32 %v287, %v571
        %v683 = vmax.f32 %v288, %v571
        %v684 = vmax.f32 %v289, %v571
        %v685 = vmax.f32 %v290, %v571
        %v686 = vmax.f32 %v291, %v571
        %v687 = vmax.f32 %v292, %v571
        %v688 = vmax.f32 %v293, %v571
        %v689 = vmax.f32 %v294, %v571
        %v690 = vmax.f32 %v295, %v571
        %v691 = vmax.f32 %v296, %v571
        %v692 = vmax.f32 %v297, %v571
        %v693 = vmax.f32 %v298, %v571
        %v694 = vmax.f32 %v299, %v571
        %v695 = vmax.f32 %v300, %v571
        %v696 = vmax.f32 %v301, %v571
        %v697 = vmax.f32 %v302, %v571
        %v698 = vmax.f32 %v303, %v571
        %v699 = vmax.f32 %v304, %v571
        %v700 = vmax.f32 %v305, %v571
        %v701 = vmax.f32 %v306, %v571
        %v702 = vmax.f32 %v307, %v571
        %v703 = vmax.f32 %v308, %v571
        %v704 = vmax.f32 %v309, %v571
        %v705 = vmax.f32 %v310, %v571
        %v706 = vmax.f32 %v311, %v571
        %v707 = vmax.f32 %v312, %v571
        %v708 = vmax.f32 %v313, %v571
        %v709 = vmax.f32 %v314, %v571
        %v710 = vmax.f32 %v315, %v571
        %v711 = vmax.f32 %v316, %v571
        %v712 = vmax.f32 %v317, %v571
        %v713 = vmax.f32 %v318, %v571
        %v714 = vmax.f32 %v319, %v571
        %v715 = vmax.f32 %v320, %v571
        %v716 = vmax.f32 %v321, %v571
        %v717 = vmax.f32 %v322, %v571
        %v718 = vmax.f32 %v323, %v571
        %v719 = vmax.f32 %v324, %v571
        %v720 = vmax.f32 %v325, %v571
        %v721 = vmax.f32 %v326, %v571
        %v722 = vmax.f32 %v327, %v571
        %v723 = vmax.f32 %v328, %v571
        %v724 = vmax.f32 %v329, %v571
        %v725 = vmax.f32 %v330, %v571
        %v726 = vmax.f32 %v331, %v571
        %v727 = vmax.f32 %v332, %v571
        %v728 = vmax.f32 %v333, %v571
        %v729 = vmax.f32 %v334, %v571
        %v730 = vmax.f32 %v335, %v571
        %v731 = vmax.f32 %v336, %v571
        %v732 = vmax.f32 %v337, %v571
        %v733 = vmax.f32 %v338, %v571
        %v734 = vmax.f32 %v339, %v571
        %v735 = vmax.f32 %v340, %v571
        %v736 = vmax.f32 %v341, %v571
        %v737 = vmax.f32 %v342, %v571
        %v738 = vmax.f32 %v343, %v571
        %v739 = vmax.f32 %v344, %v571
        %v740 = vmax.f32 %v345, %v571
        %v741 = vmax.f32 %v346, %v571
        %v742 = vmax.f32 %v347, %v571
        %v743 = vmax.f32 %v348, %v571
        %v744 = vmax.f32 %v349, %v571
        %v745 = vmax.f32 %v350, %v571
        %v746 = vmax.f32 %v351, %v571
        %v747 = vmax.f32 %v352, %v571
        %v748 = vmax.f32 %v353, %v571
        %v749 = vmax.f32 %v354, %v571
        %v750 = vmax.f32 %v355, %v571
        %v751 = vmax.f32 %v356, %v571
        %v752 = vmax.f32 %v357, %v571
        %v753 = vmax.f32 %v358, %v571
        %v754 = vmax.f32 %v359, %v571
        %v755 = vmax.f32 %v360, %v571
        %v756 = vmax.f32 %v361, %v571
        %v757 = vmax.f32 %v362, %v571
        %v758 = vmax.f32 %v363, %v571
        %v759 = vmax.f32 %v364, %v571
        %v760 = vmax.f32 %v365, %v571
        %v761 = vmax.f32 %v366, %v571
        %v762 = vmax.f32 %v367, %v571
        %v763 = vmax.f32 %v368, %v571
        %v764 = vmax.f32 %v369, %v571
        %v765 = vmax.f32 %v370, %v571
        %v766 = vmax.f32 %v371, %v571
        %v767 = vmax.f32 %v372, %v571
        %v768 = vmax.f32 %v373, %v571
        %v769 = vmax.f32 %v374, %v571
        %v770 = vmax.f32 %v375, %v571
        %v771 = vmax.f32 %v376, %v571
        %v772 = vmax.f32 %v377, %v571
        %v773 = vmax.f32 %v378, %v571
        %v774 = vmax.f32 %v379, %v571
        %v775 = vmax.f32 %v380, %v571
        %v776 = vmax.f32 %v381, %v571
        %v777 = vmax.f32 %v382, %v571
        %v778 = vmax.f32 %v383, %v571
        %v779 = vmax.f32 %v384, %v571
        %v780 = vmax.f32 %v385, %v571
        %v781 = vmax.f32 %v386, %v571
        %v782 = vmax.f32 %v387, %v571
        %v783 = vmax.f32 %v388, %v571
        %v784 = vmax.f32 %v389, %v571
        %v785 = vmax.f32 %v390, %v571
        %v786 = vmax.f32 %v391, %v571
        %v787 = vmax.f32 %v392, %v571
        %v788 = vmax.f32 %v393, %v571
        %v789 = vmax.f32 %v394, %v571
        %v790 = vmax.f32 %v395, %v571
        %v791 = vmax.f32 %v396, %v571
        %v792 = vmax.f32 %v397, %v571
        %v793 = vmax.f32 %v398, %v571
        %v794 = vmax.f32 %v399, %v571
        %v795 = vmax.f32 %v400, %v571
        %v796 = vmax.f32 %v401, %v571
        %v797 = vmax.f32 %v402, %v571
        %v798 = vmax.f32 %v403, %v571
        %v799 = vmax.f32 %v404, %v571
        %v800 = vmax.f32 %v405, %v571
        %v801 = vmax.f32 %v406, %v571
        %v802 = vmax.f32 %v407, %v571
        %v803 = vmax.f32 %v408, %v571
        %v804 = vmax.f32 %v409, %v571
        %v805 = vmax.f32 %v410, %v571
        %v806 = vmax.f32 %v411, %v571
        %v807 = vmax.f32 %v412, %v571
        %v808 = vmax.f32 %v413, %v571
        %v809 = vmax.f32 %v414, %v571
        %v810 = vmax.f32 %v415, %v571
        %v811 = vmax.f32 %v416, %v571
        %v812 = vmax.f32 %v417, %v571
        %v813 = vmax.f32 %v418, %v571
        %v814 = vmax.f32 %v419, %v571
        %v815 = vmax.f32 %v420, %v571
        %v816 = vmax.f32 %v421, %v571
        %v817 = vmax.f32 %v422, %v571
        %v818 = vmax.f32 %v423, %v571
        %v819 = vmax.f32 %v424, %v571
        %v820 = vmax.f32 %v425, %v571
        %v821 = vmax.f32 %v426, %v571
        %v822 = vmax.f32 %v427, %v571
        %v823 = vmax.f32 %v428, %v571
        %v824 = vmax.f32 %v429, %v571
        %v825 = vmax.f32 %v430, %v571
        %v826 = vmax.f32 %v431, %v571
        %v827 = vmax.f32 %v432, %v571
        %v828 = vmax.f32 %v433, %v571
        %v829 = vmax.f32 %v434, %v571
        %v830 = vmax.f32 %v435, %v571
        %v831 = vmax.f32 %v436, %v571
        %v832 = vmax.f32 %v437, %v571
        %v833 = vmax.f32 %v438, %v571
        %v834 = vmax.f32 %v439, %v571
        %v835 = vmax.f32 %v440, %v571
        %v836 = vmax.f32 %v441, %v571
        %v837 = vmax.f32 %v442, %v571
        %v838 = vmax.f32 %v443, %v571
        %v839 = vmax.f32 %v444, %v571
        %v840 = vmax.f32 %v445, %v571
        %v841 = vmax.f32 %v446, %v571
        %v842 = vmax.f32 %v447, %v571
        %v843 = vmax.f32 %v448, %v571
        %v844 = vmax.f32 %v449, %v571
        %v845 = vmax.f32 %v450, %v571
        %v846 = vmax.f32 %v451, %v571
        %v847 = vmax.f32 %v452, %v571
        %v848 = vmax.f32 %v453, %v571
        %v849 = vmax.f32 %v454, %v571
        %v850 = vmax.f32 %v455, %v571
        %v851 = vmax.f32 %v456, %v571
        %v852 = vmax.f32 %v457, %v571
        %v853 = vmax.f32 %v458, %v571
        %v854 = vmax.f32 %v459, %v571
        %v855 = vmax.f32 %v460, %v571
        %v856 = vmax.f32 %v461, %v571
        %v857 = vmax.f32 %v462, %v571
        %v858 = vmax.f32 %v463, %v571
        %v859 = vmax.f32 %v464, %v571
        %v860 = vmax.f32 %v465, %v571
        %v861 = vmax.f32 %v466, %v571
        %v862 = vmax.f32 %v467, %v571
        %v863 = vmax.f32 %v468, %v571
        %v864 = vmax.f32 %v469, %v571
        %v865 = vmax.f32 %v470, %v571
        %v866 = vmax.f32 %v471, %v571
        %v867 = vmax.f32 %v472, %v571
        %v868 = vmax.f32 %v473, %v571
        %v869 = vmax.f32 %v474, %v571
        %v870 = vmax.f32 %v475, %v571
        %v871 = vmax.f32 %v476, %v571
        %v872 = vmax.f32 %v477, %v571
        %v873 = vmax.f32 %v478, %v571
        %v874 = vmax.f32 %v479, %v571
        %v875 = vmax.f32 %v480, %v571
        %v876 = vmax.f32 %v481, %v571
        %v877 = vmax.f32 %v482, %v571
        %v878 = vmax.f32 %v483, %v571
        %v879 = vmax.f32 %v484, %v571
        %v880 = vmax.f32 %v485, %v571
        %v881 = vmax.f32 %v486, %v571
        %v882 = vmax.f32 %v487, %v571
        %v883 = vmax.f32 %v488, %v571
        %v884 = vmax.f32 %v489, %v571
        %v885 = vmax.f32 %v490, %v571
        %v886 = vmax.f32 %v491, %v571
        %v887 = vmax.f32 %v492, %v571
        %v888 = vmax.f32 %v493, %v571
        %v889 = vmax.f32 %v494, %v571
        %v890 = vmax.f32 %v495, %v571
        %v891 = vmax.f32 %v496, %v571
        %v892 = vmax.f32 %v497, %v571
        %v893 = vmax.f32 %v498, %v571
        %v894 = vmax.f32 %v499, %v571
        %v895 = vmax.f32 %v500, %v571
        %v896 = vmax.f32 %v501, %v571
        %v897 = vmax.f32 %v502, %v571
        %v898 = vmax.f32 %v503, %v571
        %v899 = vmax.f32 %v504, %v571
        %v900 = vmax.f32 %v505, %v571
        %v901 = vmax.f32 %v506, %v571
        %v902 = vmax.f32 %v507, %v571
        %v903 = vmax.f32 %v508, %v571
        %v904 = vmax.f32 %v509, %v571
        %v905 = vmax.f32 %v510, %v571
        %v906 = vmax.f32 %v511, %v571
        %v907 = vmax.f32 %v512, %v571
        %v908 = vmax.f32 %v513, %v571
        %v909 = vmax.f32 %v514, %v571
        %v910 = vmax.f32 %v515, %v571
        %v911 = vmax.f32 %v516, %v571
        %v912 = vmax.f32 %v517, %v571
        %v913 = vmax.f32 %v518, %v571
        %v914 = vmax.f32 %v519, %v571
        %v915 = vmax.f32 %v520, %v571
        %v916 = vmax.f32 %v521, %v571
        %v917 = vmax.f32 %v522, %v571
        %v918 = vmax.f32 %v523, %v571
        %v919 = vmax.f32 %v524, %v571
        %v920 = vmax.f32 %v525, %v571
        %v921 = vmax.f32 %v526, %v571
        %v922 = vmax.f32 %v527, %v571
        %v923 = vmax.f32 %v528, %v571
        %v924 = vmax.f32 %v529, %v571
        %v925 = vmax.f32 %v530, %v571
        %v926 = vmax.f32 %v531, %v571
        %v927 = vmax.f32 %v532, %v571
        %v928 = vmax.f32 %v533, %v571
        %v929 = vmax.f32 %v534, %v571
        %v930 = vmax.f32 %v535, %v571
        %v931 = vmax.f32 %v536, %v571
        %v932 = vmax.f32 %v537, %v571
        %v933 = vmax.f32 %v538, %v571
        %v934 = vmax.f32 %v539, %v571
        %v935 = vmax.f32 %v540, %v571
        %v936 = vmax.f32 %v541, %v571
        %v937 = vmax.f32 %v542, %v571
        %v938 = vmax.f32 %v543, %v571
        %v939 = vmax.f32 %v544, %v571
        %v940 = vmax.f32 %v545, %v571
        %v941 = vmax.f32 %v546, %v571
        %v942 = vmax.f32 %v547, %v571
        %v943 = vmax.f32 %v548, %v571
        %v944 = vmax.f32 %v549, %v571
        %v945 = vmax.f32 %v550, %v571
        %v946 = vmax.f32 %v551, %v571
        %v947 = vmax.f32 %v552, %v571
        %v948 = vmax.f32 %v553, %v571
        %v949 = vmax.f32 %v554, %v571
        %v950 = vmax.f32 %v555, %v571
        %v951 = vmax.f32 %v556, %v571
        %v952 = vmax.f32 %v557, %v571
        %v953 = vmax.f32 %v558, %v571
        %v954 = vmax.f32 %v559, %v571
        %v955 = vmax.f32 %v560, %v571
        %v956 = vmax.f32 %v561, %v571
        %v957 = vmax.f32 %v562, %v571
        %v958 = vmax.f32 %v563, %v571
        %v959 = vmax.f32 %v564, %v571
        %v960 = vmax.f32 %v565, %v571
        %v961 = vmax.f32 %v566, %v571
        %v962 = vmax.f32 %v567, %v571
        %v963 = vmax.f32 %v568, %v571
        %v964 = vstv %s570
        %v965 = vmin.f32 %v572, %v964
        %v966 = vmin.f32 %v573, %v964
        %v967 = vmin.f32 %v574, %v964
        %v968 = vmin.f32 %v575, %v964
        %v969 = vmin.f32 %v576, %v964
        %v970 = vmin.f32 %v577, %v964
        %v971 = vmin.f32 %v578, %v964
        %v972 = vmin.f32 %v579, %v964
        %v973 = vmin.f32 %v580, %v964
        %v974 = vmin.f32 %v581, %v964
        %v975 = vmin.f32 %v582, %v964
        %v976 = vmin.f32 %v583, %v964
        %v977 = vmin.f32 %v584, %v964
        %v978 = vmin.f32 %v585, %v964
        %v979 = vmin.f32 %v586, %v964
        %v980 = vmin.f32 %v587, %v964
        %v981 = vmin.f32 %v588, %v964
        %v982 = vmin.f32 %v589, %v964
        %v983 = vmin.f32 %v590, %v964
        %v984 = vmin.f32 %v591, %v964
        %v985 = vmin.f32 %v592, %v964
        %v986 = vmin.f32 %v593, %v964
        %v987 = vmin.f32 %v594, %v964
        %v988 = vmin.f32 %v595, %v964
        %v989 = vmin.f32 %v596, %v964
        %v990 = vmin.f32 %v597, %v964
        %v991 = vmin.f32 %v598, %v964
        %v992 = vmin.f32 %v599, %v964
        %v993 = vmin.f32 %v600, %v964
        %v994 = vmin.f32 %v601, %v964
        %v995 = vmin.f32 %v602, %v964
        %v996 = vmin.f32 %v603, %v964
        %v997 = vmin.f32 %v604, %v964
        %v998 = vmin.f32 %v605, %v964
        %v999 = vmin.f32 %v606, %v964
        %v1000 = vmin.f32 %v607, %v964
        %v1001 = vmin.f32 %v608, %v964
        %v1002 = vmin.f32 %v609, %v964
        %v1003 = vmin.f32 %v610, %v964
        %v1004 = vmin.f32 %v611, %v964
        %v1005 = vmin.f32 %v612, %v964
        %v1006 = vmin.f32 %v613, %v964
        %v1007 = vmin.f32 %v614, %v964
        %v1008 = vmin.f32 %v615, %v964
        %v1009 = vmin.f32 %v616, %v964
        %v1010 = vmin.f32 %v617, %v964
        %v1011 = vmin.f32 %v618, %v964
        %v1012 = vmin.f32 %v619, %v964
        %v1013 = vmin.f32 %v620, %v964
        %v1014 = vmin.f32 %v621, %v964
        %v1015 = vmin.f32 %v622, %v964
        %v1016 = vmin.f32 %v623, %v964
        %v1017 = vmin.f32 %v624, %v964
        %v1018 = vmin.f32 %v625, %v964
        %v1019 = vmin.f32 %v626, %v964
        %v1020 = vmin.f32 %v627, %v964
        %v1021 = vmin.f32 %v628, %v964
        %v1022 = vmin.f32 %v629, %v964
        %v1023 = vmin.f32 %v630, %v964
        %v1024 = vmin.f32 %v631, %v964
        %v1025 = vmin.f32 %v632, %v964
        %v1026 = vmin.f32 %v633, %v964
        %v1027 = vmin.f32 %v634, %v964
        %v1028 = vmin.f32 %v635, %v964
        %v1029 = vmin.f32 %v636, %v964
        %v1030 = vmin.f32 %v637, %v964
        %v1031 = vmin.f32 %v638, %v964
        %v1032 = vmin.f32 %v639, %v964
        %v1033 = vmin.f32 %v640, %v964
        %v1034 = vmin.f32 %v641, %v964
        %v1035 = vmin.f32 %v642, %v964
        %v1036 = vmin.f32 %v643, %v964
        %v1037 = vmin.f32 %v644, %v964
        %v1038 = vmin.f32 %v645, %v964
        %v1039 = vmin.f32 %v646, %v964
        %v1040 = vmin.f32 %v647, %v964
        %v1041 = vmin.f32 %v648, %v964
        %v1042 = vmin.f32 %v649, %v964
        %v1043 = vmin.f32 %v650, %v964
        %v1044 = vmin.f32 %v651, %v964
        %v1045 = vmin.f32 %v652, %v964
        %v1046 = vmin.f32 %v653, %v964
        %v1047 = vmin.f32 %v654, %v964
        %v1048 = vmin.f32 %v655, %v964
        %v1049 = vmin.f32 %v656, %v964
        %v1050 = vmin.f32 %v657, %v964
        %v1051 = vmin.f32 %v658, %v964
        %v1052 = vmin.f32 %v659, %v964
        %v1053 = vmin.f32 %v660, %v964
        %v1054 = vmin.f32 %v661, %v964
        %v1055 = vmin.f32 %v662, %v964
        %v1056 = vmin.f32 %v663, %v964
        %v1057 = vmin.f32 %v664, %v964
        %v1058 = vmin.f32 %v665, %v964
        %v1059 = vmin.f32 %v666, %v964
        %v1060 = vmin.f32 %v667, %v964
        %v1061 = vmin.f32 %v668, %v964
        %v1062 = vmin.f32 %v669, %v964
        %v1063 = vmin.f32 %v670, %v964
        %v1064 = vmin.f32 %v671, %v964
        %v1065 = vmin.f32 %v672, %v964
        %v1066 = vmin.f32 %v673, %v964
        %v1067 = vmin.f32 %v674, %v964
        %v1068 = vmin.f32 %v675, %v964
        %v1069 = vmin.f32 %v676, %v964
        %v1070 = vmin.f32 %v677, %v964
        %v1071 = vmin.f32 %v678, %v964
        %v1072 = vmin.f32 %v679, %v964
        %v1073 = vmin.f32 %v680, %v964
        %v1074 = vmin.f32 %v681, %v964
        %v1075 = vmin.f32 %v682, %v964
        %v1076 = vmin.f32 %v683, %v964
        %v1077 = vmin.f32 %v684, %v964
        %v1078 = vmin.f32 %v685, %v964
        %v1079 = vmin.f32 %v686, %v964
        %v1080 = vmin.f32 %v687, %v964
        %v1081 = vmin.f32 %v688, %v964
        %v1082 = vmin.f32 %v689, %v964
        %v1083 = vmin.f32 %v690, %v964
        %v1084 = vmin.f32 %v691, %v964
        %v1085 = vmin.f32 %v692, %v964
        %v1086 = vmin.f32 %v693, %v964
        %v1087 = vmin.f32 %v694, %v964
        %v1088 = vmin.f32 %v695, %v964
        %v1089 = vmin.f32 %v696, %v964
        %v1090 = vmin.f32 %v697, %v964
        %v1091 = vmin.f32 %v698, %v964
        %v1092 = vmin.f32 %v699, %v964
        %v1093 = vmin.f32 %v700, %v964
        %v1094 = vmin.f32 %v701, %v964
        %v1095 = vmin.f32 %v702, %v964
        %v1096 = vmin.f32 %v703, %v964
        %v1097 = vmin.f32 %v704, %v964
        %v1098 = vmin.f32 %v705, %v964
        %v1099 = vmin.f32 %v706, %v964
        %v1100 = vmin.f32 %v707, %v964
        %v1101 = vmin.f32 %v708, %v964
        %v1102 = vmin.f32 %v709, %v964
        %v1103 = vmin.f32 %v710, %v964
        %v1104 = vmin.f32 %v711, %v964
        %v1105 = vmin.f32 %v712, %v964
        %v1106 = vmin.f32 %v713, %v964
        %v1107 = vmin.f32 %v714, %v964
        %v1108 = vmin.f32 %v715, %v964
        %v1109 = vmin.f32 %v716, %v964
        %v1110 = vmin.f32 %v717, %v964
        %v1111 = vmin.f32 %v718, %v964
        %v1112 = vmin.f32 %v719, %v964
        %v1113 = vmin.f32 %v720, %v964
        %v1114 = vmin.f32 %v721, %v964
        %v1115 = vmin.f32 %v722, %v964
        %v1116 = vmin.f32 %v723, %v964
        %v1117 = vmin.f32 %v724, %v964
        %v1118 = vmin.f32 %v725, %v964
        %v1119 = vmin.f32 %v726, %v964
        %v1120 = vmin.f32 %v727, %v964
        %v1121 = vmin.f32 %v728, %v964
        %v1122 = vmin.f32 %v729, %v964
        %v1123 = vmin.f32 %v730, %v964
        %v1124 = vmin.f32 %v731, %v964
        %v1125 = vmin.f32 %v732, %v964
        %v1126 = vmin.f32 %v733, %v964
        %v1127 = vmin.f32 %v734, %v964
        %v1128 = vmin.f32 %v735, %v964
        %v1129 = vmin.f32 %v736, %v964
        %v1130 = vmin.f32 %v737, %v964
        %v1131 = vmin.f32 %v738, %v964
        %v1132 = vmin.f32 %v739, %v964
        %v1133 = vmin.f32 %v740, %v964
        %v1134 = vmin.f32 %v741, %v964
        %v1135 = vmin.f32 %v742, %v964
        %v1136 = vmin.f32 %v743, %v964
        %v1137 = vmin.f32 %v744, %v964
        %v1138 = vmin.f32 %v745, %v964
        %v1139 = vmin.f32 %v746, %v964
        %v1140 = vmin.f32 %v747, %v964
        %v1141 = vmin.f32 %v748, %v964
        %v1142 = vmin.f32 %v749, %v964
        %v1143 = vmin.f32 %v750, %v964
        %v1144 = vmin.f32 %v751, %v964
        %v1145 = vmin.f32 %v752, %v964
        %v1146 = vmin.f32 %v753, %v964
        %v1147 = vmin.f32 %v754, %v964
        %v1148 = vmin.f32 %v755, %v964
        %v1149 = vmin.f32 %v756, %v964
        %v1150 = vmin.f32 %v757, %v964
        %v1151 = vmin.f32 %v758, %v964
        %v1152 = vmin.f32 %v759, %v964
        %v1153 = vmin.f32 %v760, %v964
        %v1154 = vmin.f32 %v761, %v964
        %v1155 = vmin.f32 %v762, %v964
        %v1156 = vmin.f32 %v763, %v964
        %v1157 = vmin.f32 %v764, %v964
        %v1158 = vmin.f32 %v765, %v964
        %v1159 = vmin.f32 %v766, %v964
        %v1160 = vmin.f32 %v767, %v964
        %v1161 = vmin.f32 %v768, %v964
        %v1162 = vmin.f32 %v769, %v964
        %v1163 = vmin.f32 %v770, %v964
        %v1164 = vmin.f32 %v771, %v964
        %v1165 = vmin.f32 %v772, %v964
        %v1166 = vmin.f32 %v773, %v964
        %v1167 = vmin.f32 %v774, %v964
        %v1168 = vmin.f32 %v775, %v964
        %v1169 = vmin.f32 %v776, %v964
        %v1170 = vmin.f32 %v777, %v964
        %v1171 = vmin.f32 %v778, %v964
        %v1172 = vmin.f32 %v779, %v964
        %v1173 = vmin.f32 %v780, %v964
        %v1174 = vmin.f32 %v781, %v964
        %v1175 = vmin.f32 %v782, %v964
        %v1176 = vmin.f32 %v783, %v964
        %v1177 = vmin.f32 %v784, %v964
        %v1178 = vmin.f32 %v785, %v964
        %v1179 = vmin.f32 %v786, %v964
        %v1180 = vmin.f32 %v787, %v964
        %v1181 = vmin.f32 %v788, %v964
        %v1182 = vmin.f32 %v789, %v964
        %v1183 = vmin.f32 %v790, %v964
        %v1184 = vmin.f32 %v791, %v964
        %v1185 = vmin.f32 %v792, %v964
        %v1186 = vmin.f32 %v793, %v964
        %v1187 = vmin.f32 %v794, %v964
        %v1188 = vmin.f32 %v795, %v964
        %v1189 = vmin.f32 %v796, %v964
        %v1190 = vmin.f32 %v797, %v964
        %v1191 = vmin.f32 %v798, %v964
        %v1192 = vmin.f32 %v799, %v964
        %v1193 = vmin.f32 %v800, %v964
        %v1194 = vmin.f32 %v801, %v964
        %v1195 = vmin.f32 %v802, %v964
        %v1196 = vmin.f32 %v803, %v964
        %v1197 = vmin.f32 %v804, %v964
        %v1198 = vmin.f32 %v805, %v964
        %v1199 = vmin.f32 %v806, %v964
        %v1200 = vmin.f32 %v807, %v964
        %v1201 = vmin.f32 %v808, %v964
        %v1202 = vmin.f32 %v809, %v964
        %v1203 = vmin.f32 %v810, %v964
        %v1204 = vmin.f32 %v811, %v964
        %v1205 = vmin.f32 %v812, %v964
        %v1206 = vmin.f32 %v813, %v964
        %v1207 = vmin.f32 %v814, %v964
        %v1208 = vmin.f32 %v815, %v964
        %v1209 = vmin.f32 %v816, %v964
        %v1210 = vmin.f32 %v817, %v964
        %v1211 = vmin.f32 %v818, %v964
        %v1212 = vmin.f32 %v819, %v964
        %v1213 = vmin.f32 %v820, %v964
        %v1214 = vmin.f32 %v821, %v964
        %v1215 = vmin.f32 %v822, %v964
        %v1216 = vmin.f32 %v823, %v964
        %v1217 = vmin.f32 %v824, %v964
        %v1218 = vmin.f32 %v825, %v964
        %v1219 = vmin.f32 %v826, %v964
        %v1220 = vmin.f32 %v827, %v964
        %v1221 = vmin.f32 %v828, %v964
        %v1222 = vmin.f32 %v829, %v964
        %v1223 = vmin.f32 %v830, %v964
        %v1224 = vmin.f32 %v831, %v964
        %v1225 = vmin.f32 %v832, %v964
        %v1226 = vmin.f32 %v833, %v964
        %v1227 = vmin.f32 %v834, %v964
        %v1228 = vmin.f32 %v835, %v964
        %v1229 = vmin.f32 %v836, %v964
        %v1230 = vmin.f32 %v837, %v964
        %v1231 = vmin.f32 %v838, %v964
        %v1232 = vmin.f32 %v839, %v964
        %v1233 = vmin.f32 %v840, %v964
        %v1234 = vmin.f32 %v841, %v964
        %v1235 = vmin.f32 %v842, %v964
        %v1236 = vmin.f32 %v843, %v964
        %v1237 = vmin.f32 %v844, %v964
        %v1238 = vmin.f32 %v845, %v964
        %v1239 = vmin.f32 %v846, %v964
        %v1240 = vmin.f32 %v847, %v964
        %v1241 = vmin.f32 %v848, %v964
        %v1242 = vmin.f32 %v849, %v964
        %v1243 = vmin.f32 %v850, %v964
        %v1244 = vmin.f32 %v851, %v964
        %v1245 = vmin.f32 %v852, %v964
        %v1246 = vmin.f32 %v853, %v964
        %v1247 = vmin.f32 %v854, %v964
        %v1248 = vmin.f32 %v855, %v964
        %v1249 = vmin.f32 %v856, %v964
        %v1250 = vmin.f32 %v857, %v964
        %v1251 = vmin.f32 %v858, %v964
        %v1252 = vmin.f32 %v859, %v964
        %v1253 = vmin.f32 %v860, %v964
        %v1254 = vmin.f32 %v861, %v964
        %v1255 = vmin.f32 %v862, %v964
        %v1256 = vmin.f32 %v863, %v964
        %v1257 = vmin.f32 %v864, %v964
        %v1258 = vmin.f32 %v865, %v964
        %v1259 = vmin.f32 %v866, %v964
        %v1260 = vmin.f32 %v867, %v964
        %v1261 = vmin.f32 %v868, %v964
        %v1262 = vmin.f32 %v869, %v964
        %v1263 = vmin.f32 %v870, %v964
        %v1264 = vmin.f32 %v871, %v964
        %v1265 = vmin.f32 %v872, %v964
        %v1266 = vmin.f32 %v873, %v964
        %v1267 = vmin.f32 %v874, %v964
        %v1268 = vmin.f32 %v875, %v964
        %v1269 = vmin.f32 %v876, %v964
        %v1270 = vmin.f32 %v877, %v964
        %v1271 = vmin.f32 %v878, %v964
        %v1272 = vmin.f32 %v879, %v964
        %v1273 = vmin.f32 %v880, %v964
        %v1274 = vmin.f32 %v881, %v964
        %v1275 = vmin.f32 %v882, %v964
        %v1276 = vmin.f32 %v883, %v964
        %v1277 = vmin.f32 %v884, %v964
        %v1278 = vmin.f32 %v885, %v964
        %v1279 = vmin.f32 %v886, %v964
        %v1280 = vmin.f32 %v887, %v964
        %v1281 = vmin.f32 %v888, %v964
        %v1282 = vmin.f32 %v889, %v964
        %v1283 = vmin.f32 %v890, %v964
        %v1284 = vmin.f32 %v891, %v964
        %v1285 = vmin.f32 %v892, %v964
        %v1286 = vmin.f32 %v893, %v964
        %v1287 = vmin.f32 %v894, %v964
        %v1288 = vmin.f32 %v895, %v964
        %v1289 = vmin.f32 %v896, %v964
        %v1290 = vmin.f32 %v897, %v964
        %v1291 = vmin.f32 %v898, %v964
        %v1292 = vmin.f32 %v899, %v964
        %v1293 = vmin.f32 %v900, %v964
        %v1294 = vmin.f32 %v901, %v964
        %v1295 = vmin.f32 %v902, %v964
        %v1296 = vmin.f32 %v903, %v964
        %v1297 = vmin.f32 %v904, %v964
        %v1298 = vmin.f32 %v905, %v964
        %v1299 = vmin.f32 %v906, %v964
        %v1300 = vmin.f32 %v907, %v964
        %v1301 = vmin.f32 %v908, %v964
        %v1302 = vmin.f32 %v909, %v964
        %v1303 = vmin.f32 %v910, %v964
        %v1304 = vmin.f32 %v911, %v964
        %v1305 = vmin.f32 %v912, %v964
        %v1306 = vmin.f32 %v913, %v964
        %v1307 = vmin.f32 %v914, %v964
        %v1308 = vmin.f32 %v915, %v964
        %v1309 = vmin.f32 %v916, %v964
        %v1310 = vmin.f32 %v917, %v964
        %v1311 = vmin.f32 %v918, %v964
        %v1312 = vmin.f32 %v919, %v964
        %v1313 = vmin.f32 %v920, %v964
        %v1314 = vmin.f32 %v921, %v964
        %v1315 = vmin.f32 %v922, %v964
        %v1316 = vmin.f32 %v923, %v964
        %v1317 = vmin.f32 %v924, %v964
        %v1318 = vmin.f32 %v925, %v964
        %v1319 = vmin.f32 %v926, %v964
        %v1320 = vmin.f32 %v927, %v964
        %v1321 = vmin.f32 %v928, %v964
        %v1322 = vmin.f32 %v929, %v964
        %v1323 = vmin.f32 %v930, %v964
        %v1324 = vmin.f32 %v931, %v964
        %v1325 = vmin.f32 %v932, %v964
        %v1326 = vmin.f32 %v933, %v964
        %v1327 = vmin.f32 %v934, %v964
        %v1328 = vmin.f32 %v935, %v964
        %v1329 = vmin.f32 %v936, %v964
        %v1330 = vmin.f32 %v937, %v964
        %v1331 = vmin.f32 %v938, %v964
        %v1332 = vmin.f32 %v939, %v964
        %v1333 = vmin.f32 %v940, %v964
        %v1334 = vmin.f32 %v941, %v964
        %v1335 = vmin.f32 %v942, %v964
        %v1336 = vmin.f32 %v943, %v964
        %v1337 = vmin.f32 %v944, %v964
        %v1338 = vmin.f32 %v945, %v964
        %v1339 = vmin.f32 %v946, %v964
        %v1340 = vmin.f32 %v947, %v964
        %v1341 = vmin.f32 %v948, %v964
        %v1342 = vmin.f32 %v949, %v964
        %v1343 = vmin.f32 %v950, %v964
        %v1344 = vmin.f32 %v951, %v964
        %v1345 = vmin.f32 %v952, %v964
        %v1346 = vmin.f32 %v953, %v964
        %v1347 = vmin.f32 %v954, %v964
        %v1348 = vmin.f32 %v955, %v964
        %v1349 = vmin.f32 %v956, %v964
        %v1350 = vmin.f32 %v957, %v964
        %v1351 = vmin.f32 %v958, %v964
        %v1352 = vmin.f32 %v959, %v964
        %v1353 = vmin.f32 %v960, %v964
        %v1354 = vmin.f32 %v961, %v964
        %v1355 = vmin.f32 %v962, %v964
        %v1356 = vmin.f32 %v963, %v964
        %1357 = vst [vmem:[%s174] sm:$0xff] %v965
        %1358 = vst [vmem:[%s174 + $0x8] sm:$0xff] %v966
        %1359 = vst [vmem:[%s174 + $0x10] sm:$0xff] %v967
        %1360 = vst [vmem:[%s174 + $0x18] sm:$0xff] %v968
        %1361 = vst [vmem:[%s174 + $0x20] sm:$0xff] %v969
        %1362 = vst [vmem:[%s174 + $0x28] sm:$0xff] %v970
        %1363 = vst [vmem:[%s174 + $0x30] sm:$0xff] %v971
        %1364 = vst [vmem:[%s174 + $0x38] sm:$0xff] %v972
        %1365 = vst [vmem:[%s174 + $0x40] sm:$0xff] %v973
        %1366 = vst [vmem:[%s174 + $0x48] sm:$0xff] %v974
        %1367 = vst [vmem:[%s174 + $0x50] sm:$0xff] %v975
        %1368 = vst [vmem:[%s174 + $0x58] sm:$0xff] %v976
        %1369 = vst [vmem:[%s174 + $0x60] sm:$0xff] %v977
        %1370 = vst [vmem:[%s174 + $0x68] sm:$0xff] %v978
        %1371 = vst [vmem:[%s174 + $0x70] sm:$0xff] %v979
        %1372 = vst [vmem:[%s174 + $0x78] sm:$0xff] %v980
        %1373 = vst [vmem:[%s174 + $0x80] sm:$0xff] %v981
        %1374 = vst [vmem:[%s174 + $0x88] sm:$0xff] %v982
        %1375 = vst [vmem:[%s174 + $0x90] sm:$0xff] %v983
        %1376 = vst [vmem:[%s174 + $0x98] sm:$0xff] %v984
        %1377 = vst [vmem:[%s174 + $0xa0] sm:$0xff] %v985
        %1378 = vst [vmem:[%s174 + $0xa8] sm:$0xff] %v986
        %1379 = vst [vmem:[%s174 + $0xb0] sm:$0xff] %v987
        %1380 = vst [vmem:[%s174 + $0xb8] sm:$0xff] %v988
        %1381 = vst [vmem:[%s174 + $0xc0] sm:$0xff] %v989
        %1382 = vst [vmem:[%s174 + $0xc8] sm:$0xff] %v990
        %1383 = vst [vmem:[%s174 + $0xd0] sm:$0xff] %v991
        %1384 = vst [vmem:[%s174 + $0xd8] sm:$0xff] %v992
        %1385 = vst [vmem:[%s174 + $0xe0] sm:$0xff] %v993
        %1386 = vst [vmem:[%s174 + $0xe8] sm:$0xff] %v994
        %1387 = vst [vmem:[%s174 + $0xf0] sm:$0xff] %v995
        %1388 = vst [vmem:[%s174 + $0xf8] sm:$0xff] %v996
        %1389 = vst [vmem:[%s174 + $0x100] sm:$0xff] %v997
        %1390 = vst [vmem:[%s174 + $0x108] sm:$0xff] %v998
        %1391 = vst [vmem:[%s174 + $0x110] sm:$0xff] %v999
        %1392 = vst [vmem:[%s174 + $0x118] sm:$0xff] %v1000
        %1393 = vst [vmem:[%s174 + $0x120] sm:$0xff] %v1001
        %1394 = vst [vmem:[%s174 + $0x128] sm:$0xff] %v1002
        %1395 = vst [vmem:[%s174 + $0x130] sm:$0xff] %v1003
        %1396 = vst [vmem:[%s174 + $0x138] sm:$0xff] %v1004
        %1397 = vst [vmem:[%s174 + $0x140] sm:$0xff] %v1005
        %1398 = vst [vmem:[%s174 + $0x148] sm:$0xff] %v1006
        %1399 = vst [vmem:[%s174 + $0x150] sm:$0xff] %v1007
        %1400 = vst [vmem:[%s174 + $0x158] sm:$0xff] %v1008
        %1401 = vst [vmem:[%s174 + $0x160] sm:$0xff] %v1009
        %1402 = vst [vmem:[%s174 + $0x168] sm:$0xff] %v1010
        %1403 = vst [vmem:[%s174 + $0x170] sm:$0xff] %v1011
        %1404 = vst [vmem:[%s174 + $0x178] sm:$0xff] %v1012
        %1405 = vst [vmem:[%s174 + $0x180] sm:$0xff] %v1013
        %1406 = vst [vmem:[%s174 + $0x188] sm:$0xff] %v1014
        %1407 = vst [vmem:[%s174 + $0x190] sm:$0xff] %v1015
        %1408 = vst [vmem:[%s174 + $0x198] sm:$0xff] %v1016
        %1409 = vst [vmem:[%s174 + $0x1a0] sm:$0xff] %v1017
        %1410 = vst [vmem:[%s174 + $0x1a8] sm:$0xff] %v1018
        %1411 = vst [vmem:[%s174 + $0x1b0] sm:$0xff] %v1019
        %1412 = vst [vmem:[%s174 + $0x1b8] sm:$0xff] %v1020
        %1413 = vst [vmem:[%s174 + $0x1c0] sm:$0xff] %v1021
        %1414 = vst [vmem:[%s174 + $0x1c8] sm:$0xff] %v1022
        %1415 = vst [vmem:[%s174 + $0x1d0] sm:$0xff] %v1023
        %1416 = vst [vmem:[%s174 + $0x1d8] sm:$0xff] %v1024
        %1417 = vst [vmem:[%s174 + $0x1e0] sm:$0xff] %v1025
        %1418 = vst [vmem:[%s174 + $0x1e8] sm:$0xff] %v1026
        %1419 = vst [vmem:[%s174 + $0x1f0] sm:$0xff] %v1027
        %1420 = vst [vmem:[%s174 + $0x1f8] sm:$0xff] %v1028
        %1421 = vst [vmem:[%s174 + $0x200] sm:$0xff] %v1029
        %1422 = vst [vmem:[%s174 + $0x208] sm:$0xff] %v1030
        %1423 = vst [vmem:[%s174 + $0x210] sm:$0xff] %v1031
        %1424 = vst [vmem:[%s174 + $0x218] sm:$0xff] %v1032
        %1425 = vst [vmem:[%s174 + $0x220] sm:$0xff] %v1033
        %1426 = vst [vmem:[%s174 + $0x228] sm:$0xff] %v1034
        %1427 = vst [vmem:[%s174 + $0x230] sm:$0xff] %v1035
        %1428 = vst [vmem:[%s174 + $0x238] sm:$0xff] %v1036
        %1429 = vst [vmem:[%s174 + $0x240] sm:$0xff] %v1037
        %1430 = vst [vmem:[%s174 + $0x248] sm:$0xff] %v1038
        %1431 = vst [vmem:[%s174 + $0x250] sm:$0xff] %v1039
        %1432 = vst [vmem:[%s174 + $0x258] sm:$0xff] %v1040
        %1433 = vst [vmem:[%s174 + $0x260] sm:$0xff] %v1041
        %1434 = vst [vmem:[%s174 + $0x268] sm:$0xff] %v1042
        %1435 = vst [vmem:[%s174 + $0x270] sm:$0xff] %v1043
        %1436 = vst [vmem:[%s174 + $0x278] sm:$0xff] %v1044
        %1437 = vst [vmem:[%s174 + $0x280] sm:$0xff] %v1045
        %1438 = vst [vmem:[%s174 + $0x288] sm:$0xff] %v1046
        %1439 = vst [vmem:[%s174 + $0x290] sm:$0xff] %v1047
        %1440 = vst [vmem:[%s174 + $0x298] sm:$0xff] %v1048
        %1441 = vst [vmem:[%s174 + $0x2a0] sm:$0xff] %v1049
        %1442 = vst [vmem:[%s174 + $0x2a8] sm:$0xff] %v1050
        %1443 = vst [vmem:[%s174 + $0x2b0] sm:$0xff] %v1051
        %1444 = vst [vmem:[%s174 + $0x2b8] sm:$0xff] %v1052
        %1445 = vst [vmem:[%s174 + $0x2c0] sm:$0xff] %v1053
        %1446 = vst [vmem:[%s174 + $0x2c8] sm:$0xff] %v1054
        %1447 = vst [vmem:[%s174 + $0x2d0] sm:$0xff] %v1055
        %1448 = vst [vmem:[%s174 + $0x2d8] sm:$0xff] %v1056
        %1449 = vst [vmem:[%s174 + $0x2e0] sm:$0xff] %v1057
        %1450 = vst [vmem:[%s174 + $0x2e8] sm:$0xff] %v1058
        %1451 = vst [vmem:[%s174 + $0x2f0] sm:$0xff] %v1059
        %1452 = vst [vmem:[%s174 + $0x2f8] sm:$0xff] %v1060
        %1453 = vst [vmem:[%s174 + $0x300] sm:$0xff] %v1061
        %1454 = vst [vmem:[%s174 + $0x308] sm:$0xff] %v1062
        %1455 = vst [vmem:[%s174 + $0x310] sm:$0xff] %v1063
        %1456 = vst [vmem:[%s174 + $0x318] sm:$0xff] %v1064
        %1457 = vst [vmem:[%s174 + $0x320] sm:$0xff] %v1065
        %1458 = vst [vmem:[%s174 + $0x328] sm:$0xff] %v1066
        %1459 = vst [vmem:[%s174 + $0x330] sm:$0xff] %v1067
        %1460 = vst [vmem:[%s174 + $0x338] sm:$0xff] %v1068
        %1461 = vst [vmem:[%s174 + $0x340] sm:$0xff] %v1069
        %1462 = vst [vmem:[%s174 + $0x348] sm:$0xff] %v1070
        %1463 = vst [vmem:[%s174 + $0x350] sm:$0xff] %v1071
        %1464 = vst [vmem:[%s174 + $0x358] sm:$0xff] %v1072
        %1465 = vst [vmem:[%s174 + $0x360] sm:$0xff] %v1073
        %1466 = vst [vmem:[%s174 + $0x368] sm:$0xff] %v1074
        %1467 = vst [vmem:[%s174 + $0x370] sm:$0xff] %v1075
        %1468 = vst [vmem:[%s174 + $0x378] sm:$0xff] %v1076
        %1469 = vst [vmem:[%s174 + $0x380] sm:$0xff] %v1077
        %1470 = vst [vmem:[%s174 + $0x388] sm:$0xff] %v1078
        %1471 = vst [vmem:[%s174 + $0x390] sm:$0xff] %v1079
        %1472 = vst [vmem:[%s174 + $0x398] sm:$0xff] %v1080
        %1473 = vst [vmem:[%s174 + $0x3a0] sm:$0xff] %v1081
        %1474 = vst [vmem:[%s174 + $0x3a8] sm:$0xff] %v1082
        %1475 = vst [vmem:[%s174 + $0x3b0] sm:$0xff] %v1083
        %1476 = vst [vmem:[%s174 + $0x3b8] sm:$0xff] %v1084
        %1477 = vst [vmem:[%s174 + $0x3c0] sm:$0xff] %v1085
        %1478 = vst [vmem:[%s174 + $0x3c8] sm:$0xff] %v1086
        %1479 = vst [vmem:[%s174 + $0x3d0] sm:$0xff] %v1087
        %1480 = vst [vmem:[%s174 + $0x3d8] sm:$0xff] %v1088
        %1481 = vst [vmem:[%s174 + $0x3e0] sm:$0xff] %v1089
        %1482 = vst [vmem:[%s174 + $0x3e8] sm:$0xff] %v1090
        %1483 = vst [vmem:[%s174 + $0x3f0] sm:$0xff] %v1091
        %1484 = vst [vmem:[%s174 + $0x3f8] sm:$0xff] %v1092
        %1485 = vst [vmem:[%s174 + $0x400] sm:$0xff] %v1093
        %1486 = vst [vmem:[%s174 + $0x408] sm:$0xff] %v1094
        %1487 = vst [vmem:[%s174 + $0x410] sm:$0xff] %v1095
        %1488 = vst [vmem:[%s174 + $0x418] sm:$0xff] %v1096
        %1489 = vst [vmem:[%s174 + $0x420] sm:$0xff] %v1097
        %1490 = vst [vmem:[%s174 + $0x428] sm:$0xff] %v1098
        %1491 = vst [vmem:[%s174 + $0x430] sm:$0xff] %v1099
        %1492 = vst [vmem:[%s174 + $0x438] sm:$0xff] %v1100
        %1493 = vst [vmem:[%s174 + $0x440] sm:$0xff] %v1101
        %1494 = vst [vmem:[%s174 + $0x448] sm:$0xff] %v1102
        %1495 = vst [vmem:[%s174 + $0x450] sm:$0xff] %v1103
        %1496 = vst [vmem:[%s174 + $0x458] sm:$0xff] %v1104
        %1497 = vst [vmem:[%s174 + $0x460] sm:$0xff] %v1105
        %1498 = vst [vmem:[%s174 + $0x468] sm:$0xff] %v1106
        %1499 = vst [vmem:[%s174 + $0x470] sm:$0xff] %v1107
        %1500 = vst [vmem:[%s174 + $0x478] sm:$0xff] %v1108
        %1501 = vst [vmem:[%s174 + $0x480] sm:$0xff] %v1109
        %1502 = vst [vmem:[%s174 + $0x488] sm:$0xff] %v1110
        %1503 = vst [vmem:[%s174 + $0x490] sm:$0xff] %v1111
        %1504 = vst [vmem:[%s174 + $0x498] sm:$0xff] %v1112
        %1505 = vst [vmem:[%s174 + $0x4a0] sm:$0xff] %v1113
        %1506 = vst [vmem:[%s174 + $0x4a8] sm:$0xff] %v1114
        %1507 = vst [vmem:[%s174 + $0x4b0] sm:$0xff] %v1115
        %1508 = vst [vmem:[%s174 + $0x4b8] sm:$0xff] %v1116
        %1509 = vst [vmem:[%s174 + $0x4c0] sm:$0xff] %v1117
        %1510 = vst [vmem:[%s174 + $0x4c8] sm:$0xff] %v1118
        %1511 = vst [vmem:[%s174 + $0x4d0] sm:$0xff] %v1119
        %1512 = vst [vmem:[%s174 + $0x4d8] sm:$0xff] %v1120
        %1513 = vst [vmem:[%s174 + $0x4e0] sm:$0xff] %v1121
        %1514 = vst [vmem:[%s174 + $0x4e8] sm:$0xff] %v1122
        %1515 = vst [vmem:[%s174 + $0x4f0] sm:$0xff] %v1123
        %1516 = vst [vmem:[%s174 + $0x4f8] sm:$0xff] %v1124
        %1517 = vst [vmem:[%s174 + $0x500] sm:$0xff] %v1125
        %1518 = vst [vmem:[%s174 + $0x508] sm:$0xff] %v1126
        %1519 = vst [vmem:[%s174 + $0x510] sm:$0xff] %v1127
        %1520 = vst [vmem:[%s174 + $0x518] sm:$0xff] %v1128
        %1521 = vst [vmem:[%s174 + $0x520] sm:$0xff] %v1129
        %1522 = vst [vmem:[%s174 + $0x528] sm:$0xff] %v1130
        %1523 = vst [vmem:[%s174 + $0x530] sm:$0xff] %v1131
        %1524 = vst [vmem:[%s174 + $0x538] sm:$0xff] %v1132
        %1525 = vst [vmem:[%s174 + $0x540] sm:$0xff] %v1133
        %1526 = vst [vmem:[%s174 + $0x548] sm:$0xff] %v1134
        %1527 = vst [vmem:[%s174 + $0x550] sm:$0xff] %v1135
        %1528 = vst [vmem:[%s174 + $0x558] sm:$0xff] %v1136
        %1529 = vst [vmem:[%s174 + $0x560] sm:$0xff] %v1137
        %1530 = vst [vmem:[%s174 + $0x568] sm:$0xff] %v1138
        %1531 = vst [vmem:[%s174 + $0x570] sm:$0xff] %v1139
        %1532 = vst [vmem:[%s174 + $0x578] sm:$0xff] %v1140
        %1533 = vst [vmem:[%s174 + $0x580] sm:$0xff] %v1141
        %1534 = vst [vmem:[%s174 + $0x588] sm:$0xff] %v1142
        %1535 = vst [vmem:[%s174 + $0x590] sm:$0xff] %v1143
        %1536 = vst [vmem:[%s174 + $0x598] sm:$0xff] %v1144
        %1537 = vst [vmem:[%s174 + $0x5a0] sm:$0xff] %v1145
        %1538 = vst [vmem:[%s174 + $0x5a8] sm:$0xff] %v1146
        %1539 = vst [vmem:[%s174 + $0x5b0] sm:$0xff] %v1147
        %1540 = vst [vmem:[%s174 + $0x5b8] sm:$0xff] %v1148
        %1541 = vst [vmem:[%s174 + $0x5c0] sm:$0xff] %v1149
        %1542 = vst [vmem:[%s174 + $0x5c8] sm:$0xff] %v1150
        %1543 = vst [vmem:[%s174 + $0x5d0] sm:$0xff] %v1151
        %1544 = vst [vmem:[%s174 + $0x5d8] sm:$0xff] %v1152
        %1545 = vst [vmem:[%s174 + $0x5e0] sm:$0xff] %v1153
        %1546 = vst [vmem:[%s174 + $0x5e8] sm:$0xff] %v1154
        %1547 = vst [vmem:[%s174 + $0x5f0] sm:$0xff] %v1155
        %1548 = vst [vmem:[%s174 + $0x5f8] sm:$0xff] %v1156
        %1549 = vst [vmem:[%s174 + $0x600] sm:$0xff] %v1157
        %1550 = vst [vmem:[%s174 + $0x608] sm:$0xff] %v1158
        %1551 = vst [vmem:[%s174 + $0x610] sm:$0xff] %v1159
        %1552 = vst [vmem:[%s174 + $0x618] sm:$0xff] %v1160
        %1553 = vst [vmem:[%s174 + $0x620] sm:$0xff] %v1161
        %1554 = vst [vmem:[%s174 + $0x628] sm:$0xff] %v1162
        %1555 = vst [vmem:[%s174 + $0x630] sm:$0xff] %v1163
        %1556 = vst [vmem:[%s174 + $0x638] sm:$0xff] %v1164
        %1557 = vst [vmem:[%s174 + $0x640] sm:$0xff] %v1165
        %1558 = vst [vmem:[%s174 + $0x648] sm:$0xff] %v1166
        %1559 = vst [vmem:[%s174 + $0x650] sm:$0xff] %v1167
        %1560 = vst [vmem:[%s174 + $0x658] sm:$0xff] %v1168
        %1561 = vst [vmem:[%s174 + $0x660] sm:$0xff] %v1169
        %1562 = vst [vmem:[%s174 + $0x668] sm:$0xff] %v1170
        %1563 = vst [vmem:[%s174 + $0x670] sm:$0xff] %v1171
        %1564 = vst [vmem:[%s174 + $0x678] sm:$0xff] %v1172
        %1565 = vst [vmem:[%s174 + $0x680] sm:$0xff] %v1173
        %1566 = vst [vmem:[%s174 + $0x688] sm:$0xff] %v1174
        %1567 = vst [vmem:[%s174 + $0x690] sm:$0xff] %v1175
        %1568 = vst [vmem:[%s174 + $0x698] sm:$0xff] %v1176
        %1569 = vst [vmem:[%s174 + $0x6a0] sm:$0xff] %v1177
        %1570 = vst [vmem:[%s174 + $0x6a8] sm:$0xff] %v1178
        %1571 = vst [vmem:[%s174 + $0x6b0] sm:$0xff] %v1179
        %1572 = vst [vmem:[%s174 + $0x6b8] sm:$0xff] %v1180
        %1573 = vst [vmem:[%s174 + $0x6c0] sm:$0xff] %v1181
        %1574 = vst [vmem:[%s174 + $0x6c8] sm:$0xff] %v1182
        %1575 = vst [vmem:[%s174 + $0x6d0] sm:$0xff] %v1183
        %1576 = vst [vmem:[%s174 + $0x6d8] sm:$0xff] %v1184
        %1577 = vst [vmem:[%s174 + $0x6e0] sm:$0xff] %v1185
        %1578 = vst [vmem:[%s174 + $0x6e8] sm:$0xff] %v1186
        %1579 = vst [vmem:[%s174 + $0x6f0] sm:$0xff] %v1187
        %1580 = vst [vmem:[%s174 + $0x6f8] sm:$0xff] %v1188
        %1581 = vst [vmem:[%s174 + $0x700] sm:$0xff] %v1189
        %1582 = vst [vmem:[%s174 + $0x708] sm:$0xff] %v1190
        %1583 = vst [vmem:[%s174 + $0x710] sm:$0xff] %v1191
        %1584 = vst [vmem:[%s174 + $0x718] sm:$0xff] %v1192
        %1585 = vst [vmem:[%s174 + $0x720] sm:$0xff] %v1193
        %1586 = vst [vmem:[%s174 + $0x728] sm:$0xff] %v1194
        %1587 = vst [vmem:[%s174 + $0x730] sm:$0xff] %v1195
        %1588 = vst [vmem:[%s174 + $0x738] sm:$0xff] %v1196
        %1589 = vst [vmem:[%s174 + $0x740] sm:$0xff] %v1197
        %1590 = vst [vmem:[%s174 + $0x748] sm:$0xff] %v1198
        %1591 = vst [vmem:[%s174 + $0x750] sm:$0xff] %v1199
        %1592 = vst [vmem:[%s174 + $0x758] sm:$0xff] %v1200
        %1593 = vst [vmem:[%s174 + $0x760] sm:$0xff] %v1201
        %1594 = vst [vmem:[%s174 + $0x768] sm:$0xff] %v1202
        %1595 = vst [vmem:[%s174 + $0x770] sm:$0xff] %v1203
        %1596 = vst [vmem:[%s174 + $0x778] sm:$0xff] %v1204
        %1597 = vst [vmem:[%s174 + $0x780] sm:$0xff] %v1205
        %1598 = vst [vmem:[%s174 + $0x788] sm:$0xff] %v1206
        %1599 = vst [vmem:[%s174 + $0x790] sm:$0xff] %v1207
        %1600 = vst [vmem:[%s174 + $0x798] sm:$0xff] %v1208
        %1601 = vst [vmem:[%s174 + $0x7a0] sm:$0xff] %v1209
        %1602 = vst [vmem:[%s174 + $0x7a8] sm:$0xff] %v1210
        %1603 = vst [vmem:[%s174 + $0x7b0] sm:$0xff] %v1211
        %1604 = vst [vmem:[%s174 + $0x7b8] sm:$0xff] %v1212
        %1605 = vst [vmem:[%s174 + $0x7c0] sm:$0xff] %v1213
        %1606 = vst [vmem:[%s174 + $0x7c8] sm:$0xff] %v1214
        %1607 = vst [vmem:[%s174 + $0x7d0] sm:$0xff] %v1215
        %1608 = vst [vmem:[%s174 + $0x7d8] sm:$0xff] %v1216
        %1609 = vst [vmem:[%s174 + $0x7e0] sm:$0xff] %v1217
        %1610 = vst [vmem:[%s174 + $0x7e8] sm:$0xff] %v1218
        %1611 = vst [vmem:[%s174 + $0x7f0] sm:$0xff] %v1219
        %1612 = vst [vmem:[%s174 + $0x7f8] sm:$0xff] %v1220
        %1613 = vst [vmem:[%s174 + $0x800] sm:$0xff] %v1221
        %1614 = vst [vmem:[%s174 + $0x808] sm:$0xff] %v1222
        %1615 = vst [vmem:[%s174 + $0x810] sm:$0xff] %v1223
        %1616 = vst [vmem:[%s174 + $0x818] sm:$0xff] %v1224
        %1617 = vst [vmem:[%s174 + $0x820] sm:$0xff] %v1225
        %1618 = vst [vmem:[%s174 + $0x828] sm:$0xff] %v1226
        %1619 = vst [vmem:[%s174 + $0x830] sm:$0xff] %v1227
        %1620 = vst [vmem:[%s174 + $0x838] sm:$0xff] %v1228
        %1621 = vst [vmem:[%s174 + $0x840] sm:$0xff] %v1229
        %1622 = vst [vmem:[%s174 + $0x848] sm:$0xff] %v1230
        %1623 = vst [vmem:[%s174 + $0x850] sm:$0xff] %v1231
        %1624 = vst [vmem:[%s174 + $0x858] sm:$0xff] %v1232
        %1625 = vst [vmem:[%s174 + $0x860] sm:$0xff] %v1233
        %1626 = vst [vmem:[%s174 + $0x868] sm:$0xff] %v1234
        %1627 = vst [vmem:[%s174 + $0x870] sm:$0xff] %v1235
        %1628 = vst [vmem:[%s174 + $0x878] sm:$0xff] %v1236
        %1629 = vst [vmem:[%s174 + $0x880] sm:$0xff] %v1237
        %1630 = vst [vmem:[%s174 + $0x888] sm:$0xff] %v1238
        %1631 = vst [vmem:[%s174 + $0x890] sm:$0xff] %v1239
        %1632 = vst [vmem:[%s174 + $0x898] sm:$0xff] %v1240
        %1633 = vst [vmem:[%s174 + $0x8a0] sm:$0xff] %v1241
        %1634 = vst [vmem:[%s174 + $0x8a8] sm:$0xff] %v1242
        %1635 = vst [vmem:[%s174 + $0x8b0] sm:$0xff] %v1243
        %1636 = vst [vmem:[%s174 + $0x8b8] sm:$0xff] %v1244
        %1637 = vst [vmem:[%s174 + $0x8c0] sm:$0xff] %v1245
        %1638 = vst [vmem:[%s174 + $0x8c8] sm:$0xff] %v1246
        %1639 = vst [vmem:[%s174 + $0x8d0] sm:$0xff] %v1247
        %1640 = vst [vmem:[%s174 + $0x8d8] sm:$0xff] %v1248
        %1641 = vst [vmem:[%s174 + $0x8e0] sm:$0xff] %v1249
        %1642 = vst [vmem:[%s174 + $0x8e8] sm:$0xff] %v1250
        %1643 = vst [vmem:[%s174 + $0x8f0] sm:$0xff] %v1251
        %1644 = vst [vmem:[%s174 + $0x8f8] sm:$0xff] %v1252
        %1645 = vst [vmem:[%s174 + $0x900] sm:$0xff] %v1253
        %1646 = vst [vmem:[%s174 + $0x908] sm:$0xff] %v1254
        %1647 = vst [vmem:[%s174 + $0x910] sm:$0xff] %v1255
        %1648 = vst [vmem:[%s174 + $0x918] sm:$0xff] %v1256
        %1649 = vst [vmem:[%s174 + $0x920] sm:$0xff] %v1257
        %1650 = vst [vmem:[%s174 + $0x928] sm:$0xff] %v1258
        %1651 = vst [vmem:[%s174 + $0x930] sm:$0xff] %v1259
        %1652 = vst [vmem:[%s174 + $0x938] sm:$0xff] %v1260
        %1653 = vst [vmem:[%s174 + $0x940] sm:$0xff] %v1261
        %1654 = vst [vmem:[%s174 + $0x948] sm:$0xff] %v1262
        %1655 = vst [vmem:[%s174 + $0x950] sm:$0xff] %v1263
        %1656 = vst [vmem:[%s174 + $0x958] sm:$0xff] %v1264
        %1657 = vst [vmem:[%s174 + $0x960] sm:$0xff] %v1265
        %1658 = vst [vmem:[%s174 + $0x968] sm:$0xff] %v1266
        %1659 = vst [vmem:[%s174 + $0x970] sm:$0xff] %v1267
        %1660 = vst [vmem:[%s174 + $0x978] sm:$0xff] %v1268
        %1661 = vst [vmem:[%s174 + $0x980] sm:$0xff] %v1269
        %1662 = vst [vmem:[%s174 + $0x988] sm:$0xff] %v1270
        %1663 = vst [vmem:[%s174 + $0x990] sm:$0xff] %v1271
        %1664 = vst [vmem:[%s174 + $0x998] sm:$0xff] %v1272
        %1665 = vst [vmem:[%s174 + $0x9a0] sm:$0xff] %v1273
        %1666 = vst [vmem:[%s174 + $0x9a8] sm:$0xff] %v1274
        %1667 = vst [vmem:[%s174 + $0x9b0] sm:$0xff] %v1275
        %1668 = vst [vmem:[%s174 + $0x9b8] sm:$0xff] %v1276
        %1669 = vst [vmem:[%s174 + $0x9c0] sm:$0xff] %v1277
        %1670 = vst [vmem:[%s174 + $0x9c8] sm:$0xff] %v1278
        %1671 = vst [vmem:[%s174 + $0x9d0] sm:$0xff] %v1279
        %1672 = vst [vmem:[%s174 + $0x9d8] sm:$0xff] %v1280
        %1673 = vst [vmem:[%s174 + $0x9e0] sm:$0xff] %v1281
        %1674 = vst [vmem:[%s174 + $0x9e8] sm:$0xff] %v1282
        %1675 = vst [vmem:[%s174 + $0x9f0] sm:$0xff] %v1283
        %1676 = vst [vmem:[%s174 + $0x9f8] sm:$0xff] %v1284
        %1677 = vst [vmem:[%s174 + $0xa00] sm:$0xff] %v1285
        %1678 = vst [vmem:[%s174 + $0xa08] sm:$0xff] %v1286
        %1679 = vst [vmem:[%s174 + $0xa10] sm:$0xff] %v1287
        %1680 = vst [vmem:[%s174 + $0xa18] sm:$0xff] %v1288
        %1681 = vst [vmem:[%s174 + $0xa20] sm:$0xff] %v1289
        %1682 = vst [vmem:[%s174 + $0xa28] sm:$0xff] %v1290
        %1683 = vst [vmem:[%s174 + $0xa30] sm:$0xff] %v1291
        %1684 = vst [vmem:[%s174 + $0xa38] sm:$0xff] %v1292
        %1685 = vst [vmem:[%s174 + $0xa40] sm:$0xff] %v1293
        %1686 = vst [vmem:[%s174 + $0xa48] sm:$0xff] %v1294
        %1687 = vst [vmem:[%s174 + $0xa50] sm:$0xff] %v1295
        %1688 = vst [vmem:[%s174 + $0xa58] sm:$0xff] %v1296
        %1689 = vst [vmem:[%s174 + $0xa60] sm:$0xff] %v1297
        %1690 = vst [vmem:[%s174 + $0xa68] sm:$0xff] %v1298
        %1691 = vst [vmem:[%s174 + $0xa70] sm:$0xff] %v1299
        %1692 = vst [vmem:[%s174 + $0xa78] sm:$0xff] %v1300
        %1693 = vst [vmem:[%s174 + $0xa80] sm:$0xff] %v1301
        %1694 = vst [vmem:[%s174 + $0xa88] sm:$0xff] %v1302
        %1695 = vst [vmem:[%s174 + $0xa90] sm:$0xff] %v1303
        %1696 = vst [vmem:[%s174 + $0xa98] sm:$0xff] %v1304
        %1697 = vst [vmem:[%s174 + $0xaa0] sm:$0xff] %v1305
        %1698 = vst [vmem:[%s174 + $0xaa8] sm:$0xff] %v1306
        %1699 = vst [vmem:[%s174 + $0xab0] sm:$0xff] %v1307
        %1700 = vst [vmem:[%s174 + $0xab8] sm:$0xff] %v1308
        %1701 = vst [vmem:[%s174 + $0xac0] sm:$0xff] %v1309
        %1702 = vst [vmem:[%s174 + $0xac8] sm:$0xff] %v1310
        %1703 = vst [vmem:[%s174 + $0xad0] sm:$0xff] %v1311
        %1704 = vst [vmem:[%s174 + $0xad8] sm:$0xff] %v1312
        %1705 = vst [vmem:[%s174 + $0xae0] sm:$0xff] %v1313
        %1706 = vst [vmem:[%s174 + $0xae8] sm:$0xff] %v1314
        %1707 = vst [vmem:[%s174 + $0xaf0] sm:$0xff] %v1315
        %1708 = vst [vmem:[%s174 + $0xaf8] sm:$0xff] %v1316
        %1709 = vst [vmem:[%s174 + $0xb00] sm:$0xff] %v1317
        %1710 = vst [vmem:[%s174 + $0xb08] sm:$0xff] %v1318
        %1711 = vst [vmem:[%s174 + $0xb10] sm:$0xff] %v1319
        %1712 = vst [vmem:[%s174 + $0xb18] sm:$0xff] %v1320
        %1713 = vst [vmem:[%s174 + $0xb20] sm:$0xff] %v1321
        %1714 = vst [vmem:[%s174 + $0xb28] sm:$0xff] %v1322
        %1715 = vst [vmem:[%s174 + $0xb30] sm:$0xff] %v1323
        %1716 = vst [vmem:[%s174 + $0xb38] sm:$0xff] %v1324
        %1717 = vst [vmem:[%s174 + $0xb40] sm:$0xff] %v1325
        %1718 = vst [vmem:[%s174 + $0xb48] sm:$0xff] %v1326
        %1719 = vst [vmem:[%s174 + $0xb50] sm:$0xff] %v1327
        %1720 = vst [vmem:[%s174 + $0xb58] sm:$0xff] %v1328
        %1721 = vst [vmem:[%s174 + $0xb60] sm:$0xff] %v1329
        %1722 = vst [vmem:[%s174 + $0xb68] sm:$0xff] %v1330
        %1723 = vst [vmem:[%s174 + $0xb70] sm:$0xff] %v1331
        %1724 = vst [vmem:[%s174 + $0xb78] sm:$0xff] %v1332
        %1725 = vst [vmem:[%s174 + $0xb80] sm:$0xff] %v1333
        %1726 = vst [vmem:[%s174 + $0xb88] sm:$0xff] %v1334
        %1727 = vst [vmem:[%s174 + $0xb90] sm:$0xff] %v1335
        %1728 = vst [vmem:[%s174 + $0xb98] sm:$0xff] %v1336
        %1729 = vst [vmem:[%s174 + $0xba0] sm:$0xff] %v1337
        %1730 = vst [vmem:[%s174 + $0xba8] sm:$0xff] %v1338
        %1731 = vst [vmem:[%s174 + $0xbb0] sm:$0xff] %v1339
        %1732 = vst [vmem:[%s174 + $0xbb8] sm:$0xff] %v1340
        %1733 = vst [vmem:[%s174 + $0xbc0] sm:$0xff] %v1341
        %1734 = vst [vmem:[%s174 + $0xbc8] sm:$0xff] %v1342
        %1735 = vst [vmem:[%s174 + $0xbd0] sm:$0xff] %v1343
        %1736 = vst [vmem:[%s174 + $0xbd8] sm:$0xff] %v1344
        %1737 = vst [vmem:[%s174 + $0xbe0] sm:$0xff] %v1345
        %1738 = vst [vmem:[%s174 + $0xbe8] sm:$0xff] %v1346
        %1739 = vst [vmem:[%s174 + $0xbf0] sm:$0xff] %v1347
        %1740 = vst [vmem:[%s174 + $0xbf8] sm:$0xff] %v1348
        %1741 = vst [vmem:[%s174 + $0xc00] sm:$0xff] %v1349
        %1742 = vst [vmem:[%s174 + $0xc08] sm:$0xff] %v1350
        %1743 = vst [vmem:[%s174 + $0xc10] sm:$0xff] %v1351
        %1744 = vst [vmem:[%s174 + $0xc18] sm:$0xff] %v1352
        %1745 = vst [vmem:[%s174 + $0xc20] sm:$0xff] %v1353
        %1746 = vst [vmem:[%s174 + $0xc28] sm:$0xff] %v1354
        %1747 = vst [vmem:[%s174 + $0xc30] sm:$0xff] %v1355
        %1748 = vst [vmem:[%s174 + $0xc38] sm:$0xff] %v1356
        %s1749 = sand.u32 %s75, 1
        %s1750 = scalar_lea.sflag [#allocation4], %s1749
        %s1751 = sand.u32 %s75, 1
        %s1752 = smul.addr %s1751, 3136
        %s1753 = scalar_lea.vmem [#allocation7], %s1752
        // Predicated region
        $region37: #{tpu_custom_call.1} parent=27 // pred_check
          %p1754 = pneg %p85
        $region38: #{tpu_custom_call.1} parent=27 // pred_check_branch
          %1756 = sbr.rel (%p1754) target = $region40
        $region39: #{tpu_custom_call.1} parent=27 // pred_region
          %s1757 = smul.u32 49, %s20
          %s1759 = ssub.s32 50176, 50176
          %1760 = vsyncadd %s1750, %s1759
          %s1761 = smul.addr %s1757, 8
          %s1762 = smul.addr %s1761, 128
          %s1763 = scalar_lea.hbm %s2, %s1762
          %s1764 = sshll.u32 %s1753, 4
          %s1765 = int_to_ptr.vmem [resolvable:$true] %s1764
          %1770 = dma.vmem_to_hbm [thread:$0]  %s1765, 50176, %s1763, %s1750, 1024, 1024, 64
        $region40: #{tpu_custom_call.1} parent=27 // pred_fallthru
          _
      $region28: #{tpu_custom_call.1} parent=5 // pred_fallthru
        _
      %p1771 = scmp.le.s32.totalorder 2, %s15
      // Predicated region
      $region41: #{tpu_custom_call.1} parent=5 // pred_check
        %p1772 = pneg %p1771
      $region42: #{tpu_custom_call.1} parent=5 // pred_check_branch
        %1774 = sbr.rel (%p1772) target = $region44
      $region43: #{tpu_custom_call.1} parent=5 // pred_region
        %s1775 = ssub.s32 %s15, 2
        // Predicated region
        $region45: #{tpu_custom_call.1} parent=43 // pred_check
          %p1776 = pneg %p91
        $region46: #{tpu_custom_call.1} parent=43 // pred_check_branch
          %1778 = sbr.rel (%p1776) target = $region48
        $region47: #{tpu_custom_call.1} parent=43 // pred_region
          %s1779 = sand.u32 %s76, 1
          %s1780 = scalar_lea.sflag [#allocation4], %s1779
          %s1781 = sand.u32 %s76, 1
          %s1782 = smul.addr %s1781, 3136
          %s1783 = scalar_lea.vmem [#allocation7], %s1782
          %1784 = dma.done %s1780, 50176
        $region48: #{tpu_custom_call.1} parent=43 // pred_fallthru
          _
      $region44: #{tpu_custom_call.1} parent=5 // pred_fallthru
        _
    $region6: #{tpu_custom_call.1} parent=1 // loop_footer
      %s19 = sadd.s32 1, %s15
    $region7: #{tpu_custom_call.1} parent=1 // loop_footer_branch
      %14 = sbr.rel target = $region3
    $region8: #{tpu_custom_call.1} parent=1 // loop_exit
      _
    %1785 = vsyncpa [#allocation3], 1
    %s1786 = scalar_lea.sflag [#allocation3], 1
    %1787 = vsyncpa %s1786, 1
    %1788 = vsyncpa [#allocation4], 1
    %s1789 = scalar_lea.sflag [#allocation4], 1
    %1790 = vsyncpa %s1789, 1
    %1791 = vsyncpa [#allocation5], 1
    %s1792 = scalar_lea.sflag [#allocation5], 1
    %1793 = vsyncpa %s1792, 1

</llo_original>
